<compile_context>
chip_gen: v6e
topology: v6e:2x2x1
jax: 0.10.0
libtpu: 0.0.40
codegen_flags: <defaults>
</compile_context>

<pallas_src>
import functools

import numpy as np
import jax
import jax.numpy as jnp
from jax.experimental import pallas as pl
from jax.experimental.pallas import tpu as pltpu


def resnet_block_kernel(x_ref, m_ref, w1_ref, b1_ref, w2_ref, b2_ref, out_ref,
                        *, TH, W, Cout):
    # x_ref  : (1, 1, (TH+4)*(W+2)+2, Cin) bf16 flattened padded row-tile window
    # m_ref  : (1, (TH+2)*(W+2), 1)        f32  validity mask for extended conv1 rows
    # w1_ref : (9*Cin, Cout)               bf16 conv1 taps, BN1 scale folded in
    # b1_ref : (1, Cout)                   f32  BN1 bias
    # w2_ref : (9*Cout, Cout)              bf16 conv2 taps, BN2 scale folded in
    # b2_ref : (1, Cout)                   f32  BN2 bias
    # out_ref: (1, 1, R, L)                f32  lane-dense (R*L == TH*(W+2)*Cout)
    W2 = W + 2
    ROWS1 = (TH + 2) * W2          # extended conv1 rows (incl. pseudo-col garbage)
    ROWS2 = TH * W2                # conv2 / output rows (pseudo, garbage cols dropped
                                   # by the wrapper)

    # Load the whole tile window once (aligned full-block load), upcast to f32 so
    # all unaligned sublane slices below stay on the layout-safe f32 path.
    win = x_ref[0, 0].astype(jnp.float32)            # ((TH+4)*W2 + 2, Cin)

    # ---- conv1 via im2col: each tap is one contiguous slice, slab in registers ----
    taps1 = [win[kh * W2 + kw: kh * W2 + kw + ROWS1, :]
             for kh in range(3) for kw in range(3)]
    slab1 = jnp.concatenate(taps1, axis=1).astype(jnp.bfloat16)   # (ROWS1, 9*Cin)
    acc1 = jnp.dot(slab1, w1_ref[...], preferred_element_type=jnp.float32)

    # bn1 (scale folded into w1) + relu.  The mask zeroes the pseudo-column
    # garbage and the out-of-image halo rows so they act as conv2's zero padding.
    h = jnp.maximum(acc1 + b1_ref[...], 0.0) * m_ref[0]           # (ROWS1, Cout)

    # One zero row in front / back provides conv2's first/last padding element.
    zrow = jnp.zeros((1, Cout), jnp.float32)
    hbuf = jnp.concatenate([zrow, h, zrow], axis=0)               # (ROWS1 + 2, Cout)

    # ---- conv2 via im2col over the register-resident re-padded conv1 output ----
    taps2 = [hbuf[kh * W2 + kw: kh * W2 + kw + ROWS2, :]
             for kh in range(3) for kw in range(3)]
    slab2 = jnp.concatenate(taps2, axis=1).astype(jnp.bfloat16)   # (ROWS2, 9*Cout)
    acc2 = jnp.dot(slab2, w2_ref[...], preferred_element_type=jnp.float32)

    # ---- bn2 (scale folded) + residual add + relu ----
    res = win[2 * W2 + 1: 2 * W2 + 1 + ROWS2, :]                  # residual, from the
    out = jnp.maximum(acc2 + b2_ref[...] + res, 0.0)              # resident window

    # Lane-dense store: row-major repack to the output block's (R, L) shape
    # (identity when the fallback Cout-wide layout is in use).
    out_ref[0, 0] = out.reshape(out_ref.shape[2], out_ref.shape[3]).astype(out_ref.dtype)


def resnet_basic_block(x_nchw, w1, w2, bn1, bn2, eps=1e-5, row_tile=8):
    """x_nchw: (N, C, H, W); w*: (Cout, Cin, 3, 3) OIHW;
    bn* = (gamma, beta, running_mean, running_var), each (Cout,)."""
    N, C, H, W = x_nchw.shape
    Cout = w1.shape[0]
    assert Cout == C, "identity residual requires in_channels == out_channels"

    TH = row_tile if H % row_tile == 0 else H     # rows of output per grid step
    RT = H // TH
    W2 = W + 2
    WIN = (TH + 4) * W2 + 2                       # +2 dummy rows keep taps in-bounds
    ROWS1 = (TH + 2) * W2
    ROWS2 = TH * W2

    # NHWC; pad 2 rows (conv1 halo recompute for conv2) and 1 column each side.
    x_nhwc = jnp.transpose(x_nchw, (0, 2, 3, 1)).astype(jnp.float32)
    xpad = jnp.pad(x_nhwc, ((0, 0), (2, 2), (1, 1), (0, 0)))      # (N, H+4, W2, C)
    # Per-tile windows (halo duplicated in HBM so BlockSpecs stay non-overlapping),
    # flattened row-major and shipped as bf16 to halve input HBM traffic.
    tiles = jnp.stack([xpad[:, r * TH: r * TH + TH + 4] for r in range(RT)], axis=1)
    xt = tiles.reshape(N, RT, (TH + 4) * W2, C)
    xt = jnp.pad(xt, ((0, 0), (0, 0), (0, 2), (0, 0))).astype(jnp.bfloat16)

    # Static validity mask for the extended conv1 rows of each tile:
    # zero for pseudo-columns >= W and for halo rows that fall outside the image.
    mask_np = np.zeros((RT, TH + 2, W2), np.float32)
    for r in range(RT):
        for e in range(TH + 2):
            g = r * TH - 1 + e          # global conv1 output row this slot holds
            if 0 <= g < H:
                mask_np[r, e, :W] = 1.0
    mask = jnp.asarray(mask_np.reshape(RT, ROWS1, 1))

    def fold(bn):
        gamma, beta, mean, var = bn
        s = gamma / jnp.sqrt(var + eps)
        return s, (beta - mean * s).reshape(1, -1).astype(jnp.float32)

    s1, b1 = fold(bn1)
    s2, b2 = fold(bn2)
    # OIHW -> (kh, kw, cin, cout) -> (9*Cin, Cout); fold BN scale; ship as bf16.
    w1k = (jnp.transpose(w1, (2, 3, 1, 0)).reshape(9 * C, Cout)
           * s1[None, :]).astype(jnp.bfloat16)
    w2k = (jnp.transpose(w2, (2, 3, 1, 0)).reshape(9 * Cout, Cout)
           * s2[None, :]).astype(jnp.bfloat16)

    kernel = functools.partial(resnet_block_kernel, TH=TH, W=W, Cout=Cout)

    def run(oblk):
        return pl.pallas_call(
            kernel,
            out_shape=jax.ShapeDtypeStruct((N, RT) + oblk, jnp.float32),
            grid_spec=pltpu.PrefetchScalarGridSpec(
                num_scalar_prefetch=0,
                grid=(N, RT),
                in_specs=[
                    pl.BlockSpec((1, 1, WIN, C), lambda n, r: (n, r, 0, 0)),
                    pl.BlockSpec((1, ROWS1, 1), lambda n, r: (r, 0, 0)),
                    pl.BlockSpec((9 * C, Cout), lambda n, r: (0, 0)),
                    pl.BlockSpec((1, Cout), lambda n, r: (0, 0)),
                    pl.BlockSpec((9 * Cout, Cout), lambda n, r: (0, 0)),
                    pl.BlockSpec((1, Cout), lambda n, r: (0, 0)),
                ],
                out_specs=pl.BlockSpec((1, 1) + oblk, lambda n, r: (n, r, 0, 0)),
            ),
            compiler_params=pltpu.CompilerParams(
                dimension_semantics=("parallel", "parallel")),
        )(xt, mask, w1k, b1, w2k, b2)

    if (ROWS2 * Cout) % 128 == 0:
        try:
            out = run((ROWS2 * Cout // 128, 128))      # lane-dense output blocks
        except Exception:
            # TODO(synk): lane-dense repack not lowerable on this toolchain;
            # fall back to the known-good Cout-wide store layout.
            out = run((ROWS2, Cout))
    else:
        out = run((ROWS2, Cout))

    # (N, RT, ., .) row-major == (N, H, W2, Cout); drop the pseudo padding columns.
    out = out.reshape(N, H, W2, Cout)[:, :, :W, :]
    return jnp.transpose(out, (0, 3, 1, 2))            # back to NCHW


def reference(x_nchw, w1, w2, bn1, bn2, eps=1e-5):
    def conv(x, w):
        return jax.lax.conv_general_dilated(
            x, w, window_strides=(1, 1), padding=((1, 1), (1, 1)),
            dimension_numbers=("NCHW", "OIHW", "NCHW"))

    def bn(x, p):
        g, b, m, v = (a[None, :, None, None] for a in p)
        return (x - m) / jnp.sqrt(v + eps) * g + b

    out = jax.nn.relu(bn(conv(x_nchw, w1), bn1))
    out = bn(conv(out, w2), bn2)
    return jax.nn.relu(out + x_nchw)


if __name__ == "__main__":
    key = jax.random.PRNGKey(0)
    ks = jax.random.split(key, 11)

    N, C, H, W = 2, 8, 16, 16   # in_channels == out_channels for the residual path
    x = jax.random.normal(ks[0], (N, C, H, W), jnp.float32)
    w1 = jax.random.normal(ks[1], (C, C, 3, 3), jnp.float32) * 0.1
    w2 = jax.random.normal(ks[2], (C, C, 3, 3), jnp.float32) * 0.1

    bn1 = (1.0 + 0.1 * jax.random.normal(ks[3], (C,), jnp.float32),   # gamma
           0.1 * jax.random.normal(ks[4], (C,), jnp.float32),         # beta
           0.1 * jax.random.normal(ks[5], (C,), jnp.float32),         # running_mean
           0.5 + jax.nn.softplus(jax.random.normal(ks[6], (C,), jnp.float32)))  # var
    bn2 = (1.0 + 0.1 * jax.random.normal(ks[7], (C,), jnp.float32),
           0.1 * jax.random.normal(ks[8], (C,), jnp.float32),
           0.1 * jax.random.normal(ks[9], (C,), jnp.float32),
           0.5 + jax.nn.softplus(jax.random.normal(ks[10], (C,), jnp.float32)))

    out = jax.block_until_ready(resnet_basic_block(x, w1, w2, bn1, bn2))
    ref = jax.block_until_ready(reference(x, w1, w2, bn1, bn2))

    assert out.shape == (N, C, H, W)
    # bf16 MXU operands / bf16 input with f32 accumulation -> loosened tolerance.
    err = float(jnp.max(jnp.abs(out - ref)))
    assert err < 5e-2, f"max abs err {err}"

    print("KERNEL_OK")
</pallas_src>

<mosaic_0001>
module attributes {stable_mosaic.version = 11 : i64} {
  func.func @resnet_block_kernel(%arg0: i32, %arg1: i32, %arg2: memref<1x1x218x8xbf16, #tpu.memory_space<vmem>>, %arg3: memref<1x180x1xf32, #tpu.memory_space<vmem>>, %arg4: memref<72x8xbf16, #tpu.memory_space<vmem>>, %arg5: memref<1x8xf32, #tpu.memory_space<vmem>>, %arg6: memref<72x8xbf16, #tpu.memory_space<vmem>>, %arg7: memref<1x8xf32, #tpu.memory_space<vmem>>, %arg8: memref<1x1x9x128xf32, #tpu.memory_space<vmem>>) attributes {dimension_semantics = [#tpu.dimension_semantics<parallel>, #tpu.dimension_semantics<parallel>], iteration_bounds = array<i64: 2, 2>, scalar_prefetch = 0 : i64, scratch_operands = 0 : i64, tpu.core_type = #tpu.core_type<tc>, window_params = [{transform_indices = @transform_0, window_bounds = array<i64: 1, 1, 218, 8>}, {transform_indices = @transform_1, window_bounds = array<i64: 1, 180, 1>}, {pipeline_mode = #tpu.pipeline_mode<synchronous>, transform_indices = @transform_2, window_bounds = array<i64: 72, 8>}, {pipeline_mode = #tpu.pipeline_mode<synchronous>, transform_indices = @transform_3, window_bounds = array<i64: 1, 8>}, {pipeline_mode = #tpu.pipeline_mode<synchronous>, transform_indices = @transform_4, window_bounds = array<i64: 72, 8>}, {pipeline_mode = #tpu.pipeline_mode<synchronous>, transform_indices = @transform_5, window_bounds = array<i64: 1, 8>}, {transform_indices = @transform_6, window_bounds = array<i64: 1, 1, 9, 128>}]} {
    %c0 = arith.constant 0 : index
    %c0_0 = arith.constant 0 : index
    %c0_1 = arith.constant 0 : index
    %c0_2 = arith.constant 0 : index
    %0 = vector.load %arg2[%c0, %c0_0, %c0_1, %c0_2] : memref<1x1x218x8xbf16, #tpu.memory_space<vmem>>, vector<1x1x218x8xbf16>
    %1 = vector.shape_cast %0 : vector<1x1x218x8xbf16> to vector<218x8xbf16>
    %2 = arith.extf %1 : vector<218x8xbf16> to vector<218x8xf32>
    %3 = vector.extract_strided_slice %2 {offsets = [0, 0], sizes = [180, 8], strides = [1, 1]} : vector<218x8xf32> to vector<180x8xf32>
    %4 = vector.extract_strided_slice %2 {offsets = [1, 0], sizes = [180, 8], strides = [1, 1]} : vector<218x8xf32> to vector<180x8xf32>
    %5 = vector.extract_strided_slice %2 {offsets = [2, 0], sizes = [180, 8], strides = [1, 1]} : vector<218x8xf32> to vector<180x8xf32>
    %6 = vector.extract_strided_slice %2 {offsets = [18, 0], sizes = [180, 8], strides = [1, 1]} : vector<218x8xf32> to vector<180x8xf32>
    %7 = vector.extract_strided_slice %2 {offsets = [19, 0], sizes = [180, 8], strides = [1, 1]} : vector<218x8xf32> to vector<180x8xf32>
    %8 = vector.extract_strided_slice %2 {offsets = [20, 0], sizes = [180, 8], strides = [1, 1]} : vector<218x8xf32> to vector<180x8xf32>
    %9 = vector.extract_strided_slice %2 {offsets = [36, 0], sizes = [180, 8], strides = [1, 1]} : vector<218x8xf32> to vector<180x8xf32>
    %10 = vector.extract_strided_slice %2 {offsets = [37, 0], sizes = [180, 8], strides = [1, 1]} : vector<218x8xf32> to vector<180x8xf32>
    %11 = vector.extract_strided_slice %2 {offsets = [38, 0], sizes = [180, 8], strides = [1, 1]} : vector<218x8xf32> to vector<180x8xf32>
    %12 = tpu.concatenate %3, %4, %5, %6, %7, %8, %9, %10, %11 in 1 : vector<180x8xf32>, vector<180x8xf32>, vector<180x8xf32>, vector<180x8xf32>, vector<180x8xf32>, vector<180x8xf32>, vector<180x8xf32>, vector<180x8xf32>, vector<180x8xf32> -> vector<180x72xf32>
    %13 = arith.truncf %12 : vector<180x72xf32> to vector<180x72xbf16>
    %c0_3 = arith.constant 0 : index
    %c0_4 = arith.constant 0 : index
    %14 = vector.load %arg4[%c0_3, %c0_4] : memref<72x8xbf16, #tpu.memory_space<vmem>>, vector<72x8xbf16>
    %cst = arith.constant dense<0.000000e+00> : vector<180x8xf32>
    %15 = tpu.matmul %13, %14, %cst {dimension_numbers = #tpu.dot_dimension_numbers<[1], [0], [0], [1], [0, 0, 1, 1], [], []>} : vector<180x72xbf16>, vector<72x8xbf16>, vector<180x8xf32> -> vector<180x8xf32>
    %c0_5 = arith.constant 0 : index
    %c0_6 = arith.constant 0 : index
    %16 = vector.load %arg5[%c0_5, %c0_6] : memref<1x8xf32, #tpu.memory_space<vmem>>, vector<1x8xf32>
    %17 = vector.broadcast %16 : vector<1x8xf32> to vector<180x8xf32>
    %18 = arith.addf %15, %17 : vector<180x8xf32>
    %cst_7 = arith.constant 0.000000e+00 : f32
    %19 = vector.broadcast %cst_7 : f32 to vector<180x8xf32>
    %20 = arith.maximumf %18, %19 : vector<180x8xf32>
    %c0_8 = arith.constant 0 : index
    %c0_9 = arith.constant 0 : index
    %c0_10 = arith.constant 0 : index
    %21 = vector.load %arg3[%c0_8, %c0_9, %c0_10] : memref<1x180x1xf32, #tpu.memory_space<vmem>>, vector<1x180x1xf32>
    %22 = vector.shape_cast %21 : vector<1x180x1xf32> to vector<180x1xf32>
    %23 = vector.broadcast %22 : vector<180x1xf32> to vector<180x8xf32>
    %24 = arith.mulf %20, %23 : vector<180x8xf32>
    %cst_11 = arith.constant 0.000000e+00 : f32
    %25 = vector.broadcast %cst_11 : f32 to vector<1x8xf32>
    %26 = tpu.concatenate %25, %24, %25 in 0 : vector<1x8xf32>, vector<180x8xf32>, vector<1x8xf32> -> vector<182x8xf32>
    %27 = vector.extract_strided_slice %26 {offsets = [0, 0], sizes = [144, 8], strides = [1, 1]} : vector<182x8xf32> to vector<144x8xf32>
    %28 = vector.extract_strided_slice %26 {offsets = [1, 0], sizes = [144, 8], strides = [1, 1]} : vector<182x8xf32> to vector<144x8xf32>
    %29 = vector.extract_strided_slice %26 {offsets = [2, 0], sizes = [144, 8], strides = [1, 1]} : vector<182x8xf32> to vector<144x8xf32>
    %30 = vector.extract_strided_slice %26 {offsets = [18, 0], sizes = [144, 8], strides = [1, 1]} : vector<182x8xf32> to vector<144x8xf32>
    %31 = vector.extract_strided_slice %26 {offsets = [19, 0], sizes = [144, 8], strides = [1, 1]} : vector<182x8xf32> to vector<144x8xf32>
    %32 = vector.extract_strided_slice %26 {offsets = [20, 0], sizes = [144, 8], strides = [1, 1]} : vector<182x8xf32> to vector<144x8xf32>
    %33 = vector.extract_strided_slice %26 {offsets = [36, 0], sizes = [144, 8], strides = [1, 1]} : vector<182x8xf32> to vector<144x8xf32>
    %34 = vector.extract_strided_slice %26 {offsets = [37, 0], sizes = [144, 8], strides = [1, 1]} : vector<182x8xf32> to vector<144x8xf32>
    %35 = vector.extract_strided_slice %26 {offsets = [38, 0], sizes = [144, 8], strides = [1, 1]} : vector<182x8xf32> to vector<144x8xf32>
    %36 = tpu.concatenate %27, %28, %29, %30, %31, %32, %33, %34, %35 in 1 : vector<144x8xf32>, vector<144x8xf32>, vector<144x8xf32>, vector<144x8xf32>, vector<144x8xf32>, vector<144x8xf32>, vector<144x8xf32>, vector<144x8xf32>, vector<144x8xf32> -> vector<144x72xf32>
    %37 = arith.truncf %36 : vector<144x72xf32> to vector<144x72xbf16>
    %c0_12 = arith.constant 0 : index
    %c0_13 = arith.constant 0 : index
    %38 = vector.load %arg6[%c0_12, %c0_13] : memref<72x8xbf16, #tpu.memory_space<vmem>>, vector<72x8xbf16>
    %cst_14 = arith.constant dense<0.000000e+00> : vector<144x8xf32>
    %39 = tpu.matmul %37, %38, %cst_14 {dimension_numbers = #tpu.dot_dimension_numbers<[1], [0], [0], [1], [0, 0, 1, 1], [], []>} : vector<144x72xbf16>, vector<72x8xbf16>, vector<144x8xf32> -> vector<144x8xf32>
    %40 = vector.extract_strided_slice %2 {offsets = [37, 0], sizes = [144, 8], strides = [1, 1]} : vector<218x8xf32> to vector<144x8xf32>
    %c0_15 = arith.constant 0 : index
    %c0_16 = arith.constant 0 : index
    %41 = vector.load %arg7[%c0_15, %c0_16] : memref<1x8xf32, #tpu.memory_space<vmem>>, vector<1x8xf32>
    %42 = vector.broadcast %41 : vector<1x8xf32> to vector<144x8xf32>
    %43 = arith.addf %39, %42 : vector<144x8xf32>
    %44 = arith.addf %43, %40 : vector<144x8xf32>
    %cst_17 = arith.constant 0.000000e+00 : f32
    %45 = vector.broadcast %cst_17 : f32 to vector<144x8xf32>
    %46 = arith.maximumf %44, %45 : vector<144x8xf32>
    %47 = vector.shape_cast %46 : vector<144x8xf32> to vector<9x128xf32>
    %c0_18 = arith.constant 0 : index
    %c0_19 = arith.constant 0 : index
    %c0_20 = arith.constant 0 : index
    %c0_21 = arith.constant 0 : index
    %48 = vector.load %arg8[%c0_18, %c0_19, %c0_20, %c0_21] : memref<1x1x9x128xf32, #tpu.memory_space<vmem>>, vector<1x1x9x128xf32>
    %49 = vector.shape_cast %48 : vector<1x1x9x128xf32> to vector<9x128xf32>
    %50 = vector.shape_cast %47 : vector<9x128xf32> to vector<1x1x9x128xf32>
    tpu.vector_store %arg8[%c0_18, %c0_19, %c0_20, %c0_21], %50 {strides = array<i32>} : memref<1x1x9x128xf32, #tpu.memory_space<vmem>>, vector<1x1x9x128xf32>,
    return
  }
  func.func @transform_0(%arg0: i32, %arg1: i32) -> (i32, i32, i32, i32) {
    %c0_i32 = arith.constant 0 : i32
    %c0_i32_0 = arith.constant 0 : i32
    %c0_i32_1 = arith.constant 0 : i32
    return %arg0, %arg1, %c0_i32, %c0_i32_0 : i32, i32, i32, i32
  }
  func.func @transform_1(%arg0: i32, %arg1: i32) -> (i32, i32, i32) {
    %c0_i32 = arith.constant 0 : i32
    %c0_i32_0 = arith.constant 0 : i32
    %c0_i32_1 = arith.constant 0 : i32
    return %arg1, %c0_i32, %c0_i32_0 : i32, i32, i32
  }
  func.func @transform_2(%arg0: i32, %arg1: i32) -> (i32, i32) {
    %c0_i32 = arith.constant 0 : i32
    %c0_i32_0 = arith.constant 0 : i32
    %c0_i32_1 = arith.constant 0 : i32
    return %c0_i32, %c0_i32_0 : i32, i32
  }
  func.func @transform_3(%arg0: i32, %arg1: i32) -> (i32, i32) {
    %c0_i32 = arith.constant 0 : i32
    %c0_i32_0 = arith.constant 0 : i32
    %c0_i32_1 = arith.constant 0 : i32
    return %c0_i32, %c0_i32_0 : i32, i32
  }
  func.func @transform_4(%arg0: i32, %arg1: i32) -> (i32, i32) {
    %c0_i32 = arith.constant 0 : i32
    %c0_i32_0 = arith.constant 0 : i32
    %c0_i32_1 = arith.constant 0 : i32
    return %c0_i32, %c0_i32_0 : i32, i32
  }
  func.func @transform_5(%arg0: i32, %arg1: i32) -> (i32, i32) {
    %c0_i32 = arith.constant 0 : i32
    %c0_i32_0 = arith.constant 0 : i32
    %c0_i32_1 = arith.constant 0 : i32
    return %c0_i32, %c0_i32_0 : i32, i32
  }
  func.func @transform_6(%arg0: i32, %arg1: i32) -> (i32, i32, i32, i32) {
    %c0_i32 = arith.constant 0 : i32
    %c0_i32_0 = arith.constant 0 : i32
    %c0_i32_1 = arith.constant 0 : i32
    return %arg0, %arg1, %c0_i32, %c0_i32_0 : i32, i32, i32, i32
  }
}

module attributes {stable_mosaic.version = 11 : i64} {
  func.func @resnet_block_kernel(%arg0: i32, %arg1: i32, %arg2: memref<1x1x218x8xbf16, #tpu.memory_space<vmem>>, %arg3: memref<1x180x1xf32, #tpu.memory_space<vmem>>, %arg4: memref<72x8xbf16, #tpu.memory_space<vmem>>, %arg5: memref<1x8xf32, #tpu.memory_space<vmem>>, %arg6: memref<72x8xbf16, #tpu.memory_space<vmem>>, %arg7: memref<1x8xf32, #tpu.memory_space<vmem>>, %arg8: memref<1x1x144x8xf32, #tpu.memory_space<vmem>>) attributes {dimension_semantics = [#tpu.dimension_semantics<parallel>, #tpu.dimension_semantics<parallel>], iteration_bounds = array<i64: 2, 2>, scalar_prefetch = 0 : i64, scratch_operands = 0 : i64, tpu.core_type = #tpu.core_type<tc>, window_params = [{transform_indices = @transform_0, window_bounds = array<i64: 1, 1, 218, 8>}, {transform_indices = @transform_1, window_bounds = array<i64: 1, 180, 1>}, {pipeline_mode = #tpu.pipeline_mode<synchronous>, transform_indices = @transform_2, window_bounds = array<i64: 72, 8>}, {pipeline_mode = #tpu.pipeline_mode<synchronous>, transform_indices = @transform_3, window_bounds = array<i64: 1, 8>}, {pipeline_mode = #tpu.pipeline_mode<synchronous>, transform_indices = @transform_4, window_bounds = array<i64: 72, 8>}, {pipeline_mode = #tpu.pipeline_mode<synchronous>, transform_indices = @transform_5, window_bounds = array<i64: 1, 8>}, {transform_indices = @transform_6, window_bounds = array<i64: 1, 1, 144, 8>}]} {
    %c0 = arith.constant 0 : index
    %c0_0 = arith.constant 0 : index
    %c0_1 = arith.constant 0 : index
    %c0_2 = arith.constant 0 : index
    %0 = vector.load %arg2[%c0, %c0_0, %c0_1, %c0_2] : memref<1x1x218x8xbf16, #tpu.memory_space<vmem>>, vector<1x1x218x8xbf16>
    %1 = vector.shape_cast %0 : vector<1x1x218x8xbf16> to vector<218x8xbf16>
    %2 = arith.extf %1 : vector<218x8xbf16> to vector<218x8xf32>
    %3 = vector.extract_strided_slice %2 {offsets = [0, 0], sizes = [180, 8], strides = [1, 1]} : vector<218x8xf32> to vector<180x8xf32>
    %4 = vector.extract_strided_slice %2 {offsets = [1, 0], sizes = [180, 8], strides = [1, 1]} : vector<218x8xf32> to vector<180x8xf32>
    %5 = vector.extract_strided_slice %2 {offsets = [2, 0], sizes = [180, 8], strides = [1, 1]} : vector<218x8xf32> to vector<180x8xf32>
    %6 = vector.extract_strided_slice %2 {offsets = [18, 0], sizes = [180, 8], strides = [1, 1]} : vector<218x8xf32> to vector<180x8xf32>
    %7 = vector.extract_strided_slice %2 {offsets = [19, 0], sizes = [180, 8], strides = [1, 1]} : vector<218x8xf32> to vector<180x8xf32>
    %8 = vector.extract_strided_slice %2 {offsets = [20, 0], sizes = [180, 8], strides = [1, 1]} : vector<218x8xf32> to vector<180x8xf32>
    %9 = vector.extract_strided_slice %2 {offsets = [36, 0], sizes = [180, 8], strides = [1, 1]} : vector<218x8xf32> to vector<180x8xf32>
    %10 = vector.extract_strided_slice %2 {offsets = [37, 0], sizes = [180, 8], strides = [1, 1]} : vector<218x8xf32> to vector<180x8xf32>
    %11 = vector.extract_strided_slice %2 {offsets = [38, 0], sizes = [180, 8], strides = [1, 1]} : vector<218x8xf32> to vector<180x8xf32>
    %12 = tpu.concatenate %3, %4, %5, %6, %7, %8, %9, %10, %11 in 1 : vector<180x8xf32>, vector<180x8xf32>, vector<180x8xf32>, vector<180x8xf32>, vector<180x8xf32>, vector<180x8xf32>, vector<180x8xf32>, vector<180x8xf32>, vector<180x8xf32> -> vector<180x72xf32>
    %13 = arith.truncf %12 : vector<180x72xf32> to vector<180x72xbf16>
    %c0_3 = arith.constant 0 : index
    %c0_4 = arith.constant 0 : index
    %14 = vector.load %arg4[%c0_3, %c0_4] : memref<72x8xbf16, #tpu.memory_space<vmem>>, vector<72x8xbf16>
    %cst = arith.constant dense<0.000000e+00> : vector<180x8xf32>
    %15 = tpu.matmul %13, %14, %cst {dimension_numbers = #tpu.dot_dimension_numbers<[1], [0], [0], [1], [0, 0, 1, 1], [], []>} : vector<180x72xbf16>, vector<72x8xbf16>, vector<180x8xf32> -> vector<180x8xf32>
    %c0_5 = arith.constant 0 : index
    %c0_6 = arith.constant 0 : index
    %16 = vector.load %arg5[%c0_5, %c0_6] : memref<1x8xf32, #tpu.memory_space<vmem>>, vector<1x8xf32>
    %17 = vector.broadcast %16 : vector<1x8xf32> to vector<180x8xf32>
    %18 = arith.addf %15, %17 : vector<180x8xf32>
    %cst_7 = arith.constant 0.000000e+00 : f32
    %19 = vector.broadcast %cst_7 : f32 to vector<180x8xf32>
    %20 = arith.maximumf %18, %19 : vector<180x8xf32>
    %c0_8 = arith.constant 0 : index
    %c0_9 = arith.constant 0 : index
    %c0_10 = arith.constant 0 : index
    %21 = vector.load %arg3[%c0_8, %c0_9, %c0_10] : memref<1x180x1xf32, #tpu.memory_space<vmem>>, vector<1x180x1xf32>
    %22 = vector.shape_cast %21 : vector<1x180x1xf32> to vector<180x1xf32>
    %23 = vector.broadcast %22 : vector<180x1xf32> to vector<180x8xf32>
    %24 = arith.mulf %20, %23 : vector<180x8xf32>
    %cst_11 = arith.constant 0.000000e+00 : f32
    %25 = vector.broadcast %cst_11 : f32 to vector<1x8xf32>
    %26 = tpu.concatenate %25, %24, %25 in 0 : vector<1x8xf32>, vector<180x8xf32>, vector<1x8xf32> -> vector<182x8xf32>
    %27 = vector.extract_strided_slice %26 {offsets = [0, 0], sizes = [144, 8], strides = [1, 1]} : vector<182x8xf32> to vector<144x8xf32>
    %28 = vector.extract_strided_slice %26 {offsets = [1, 0], sizes = [144, 8], strides = [1, 1]} : vector<182x8xf32> to vector<144x8xf32>
    %29 = vector.extract_strided_slice %26 {offsets = [2, 0], sizes = [144, 8], strides = [1, 1]} : vector<182x8xf32> to vector<144x8xf32>
    %30 = vector.extract_strided_slice %26 {offsets = [18, 0], sizes = [144, 8], strides = [1, 1]} : vector<182x8xf32> to vector<144x8xf32>
    %31 = vector.extract_strided_slice %26 {offsets = [19, 0], sizes = [144, 8], strides = [1, 1]} : vector<182x8xf32> to vector<144x8xf32>
    %32 = vector.extract_strided_slice %26 {offsets = [20, 0], sizes = [144, 8], strides = [1, 1]} : vector<182x8xf32> to vector<144x8xf32>
    %33 = vector.extract_strided_slice %26 {offsets = [36, 0], sizes = [144, 8], strides = [1, 1]} : vector<182x8xf32> to vector<144x8xf32>
    %34 = vector.extract_strided_slice %26 {offsets = [37, 0], sizes = [144, 8], strides = [1, 1]} : vector<182x8xf32> to vector<144x8xf32>
    %35 = vector.extract_strided_slice %26 {offsets = [38, 0], sizes = [144, 8], strides = [1, 1]} : vector<182x8xf32> to vector<144x8xf32>
    %36 = tpu.concatenate %27, %28, %29, %30, %31, %32, %33, %34, %35 in 1 : vector<144x8xf32>, vector<144x8xf32>, vector<144x8xf32>, vector<144x8xf32>, vector<144x8xf32>, vector<144x8xf32>, vector<144x8xf32>, vector<144x8xf32>, vector<144x8xf32> -> vector<144x72xf32>
    %37 = arith.truncf %36 : vector<144x72xf32> to vector<144x72xbf16>
    %c0_12 = arith.constant 0 : index
    %c0_13 = arith.constant 0 : index
    %38 = vector.load %arg6[%c0_12, %c0_13] : memref<72x8xbf16, #tpu.memory_space<vmem>>, vector<72x8xbf16>
    %cst_14 = arith.constant dense<0.000000e+00> : vector<144x8xf32>
    %39 = tpu.matmul %37, %38, %cst_14 {dimension_numbers = #tpu.dot_dimension_numbers<[1], [0], [0], [1], [0, 0, 1, 1], [], []>} : vector<144x72xbf16>, vector<72x8xbf16>, vector<144x8xf32> -> vector<144x8xf32>
    %40 = vector.extract_strided_slice %2 {offsets = [37, 0], sizes = [144, 8], strides = [1, 1]} : vector<218x8xf32> to vector<144x8xf32>
    %c0_15 = arith.constant 0 : index
    %c0_16 = arith.constant 0 : index
    %41 = vector.load %arg7[%c0_15, %c0_16] : memref<1x8xf32, #tpu.memory_space<vmem>>, vector<1x8xf32>
    %42 = vector.broadcast %41 : vector<1x8xf32> to vector<144x8xf32>
    %43 = arith.addf %39, %42 : vector<144x8xf32>
    %44 = arith.addf %43, %40 : vector<144x8xf32>
    %cst_17 = arith.constant 0.000000e+00 : f32
    %45 = vector.broadcast %cst_17 : f32 to vector<144x8xf32>
    %46 = arith.maximumf %44, %45 : vector<144x8xf32>
    %c0_18 = arith.constant 0 : index
    %c0_19 = arith.constant 0 : index
    %c0_20 = arith.constant 0 : index
    %c0_21 = arith.constant 0 : index
    %47 = vector.load %arg8[%c0_18, %c0_19, %c0_20, %c0_21] : memref<1x1x144x8xf32, #tpu.memory_space<vmem>>, vector<1x1x144x8xf32>
    %48 = vector.shape_cast %47 : vector<1x1x144x8xf32> to vector<144x8xf32>
    %49 = vector.shape_cast %46 : vector<144x8xf32> to vector<1x1x144x8xf32>
    tpu.vector_store %arg8[%c0_18, %c0_19, %c0_20, %c0_21], %49 {strides = array<i32>} : memref<1x1x144x8xf32, #tpu.memory_space<vmem>>, vector<1x1x144x8xf32>,
    return
  }
  func.func @transform_0(%arg0: i32, %arg1: i32) -> (i32, i32, i32, i32) {
    %c0_i32 = arith.constant 0 : i32
    %c0_i32_0 = arith.constant 0 : i32
    %c0_i32_1 = arith.constant 0 : i32
    return %arg0, %arg1, %c0_i32, %c0_i32_0 : i32, i32, i32, i32
  }
  func.func @transform_1(%arg0: i32, %arg1: i32) -> (i32, i32, i32) {
    %c0_i32 = arith.constant 0 : i32
    %c0_i32_0 = arith.constant 0 : i32
    %c0_i32_1 = arith.constant 0 : i32
    return %arg1, %c0_i32, %c0_i32_0 : i32, i32, i32
  }
  func.func @transform_2(%arg0: i32, %arg1: i32) -> (i32, i32) {
    %c0_i32 = arith.constant 0 : i32
    %c0_i32_0 = arith.constant 0 : i32
    %c0_i32_1 = arith.constant 0 : i32
    return %c0_i32, %c0_i32_0 : i32, i32
  }
  func.func @transform_3(%arg0: i32, %arg1: i32) -> (i32, i32) {
    %c0_i32 = arith.constant 0 : i32
    %c0_i32_0 = arith.constant 0 : i32
    %c0_i32_1 = arith.constant 0 : i32
    return %c0_i32, %c0_i32_0 : i32, i32
  }
  func.func @transform_4(%arg0: i32, %arg1: i32) -> (i32, i32) {
    %c0_i32 = arith.constant 0 : i32
    %c0_i32_0 = arith.constant 0 : i32
    %c0_i32_1 = arith.constant 0 : i32
    return %c0_i32, %c0_i32_0 : i32, i32
  }
  func.func @transform_5(%arg0: i32, %arg1: i32) -> (i32, i32) {
    %c0_i32 = arith.constant 0 : i32
    %c0_i32_0 = arith.constant 0 : i32
    %c0_i32_1 = arith.constant 0 : i32
    return %c0_i32, %c0_i32_0 : i32, i32
  }
  func.func @transform_6(%arg0: i32, %arg1: i32) -> (i32, i32, i32, i32) {
    %c0_i32 = arith.constant 0 : i32
    %c0_i32_0 = arith.constant 0 : i32
    %c0_i32_1 = arith.constant 0 : i32
    return %arg0, %arg1, %c0_i32, %c0_i32_0 : i32, i32, i32, i32
  }
}

</mosaic_0001>

<llo_original>
// kernel: tpu_custom_call.1
$region0: #{tpu_custom_call.1}
  #allocation0 [shape = 'u32[]', space=smem, size = 0x4, offset = 0x4, fixed_abs, tag = 'smem constant byte address 0x4 - core index']
  #allocation1 [shape = 'u32[144,128]{1,0:T(1,128)}', space=vmem, size = 0x12000, scoped, tag = 'internal scratch']
  %s0 = inlined_call_operand.vmem [shape: bf16[2,2,218,8], index: 0, kind: input, shape index: {}]
  %s1 = inlined_call_operand.vmem [shape: f32[2,180,1], index: 1, kind: input, shape index: {}]
  %s2 = inlined_call_operand.vmem [shape: bf16[72,8], index: 2, kind: input, shape index: {}]
  %s3 = inlined_call_operand.vmem [shape: f32[1,8], index: 3, kind: input, shape index: {}]
  %s4 = inlined_call_operand.vmem [shape: bf16[72,8], index: 4, kind: input, shape index: {}]
  %s5 = inlined_call_operand.vmem [shape: f32[1,8], index: 5, kind: input, shape index: {}]
  %s6 = inlined_call_operand.vmem [shape: f32[2,2,144,8], index: 6, kind: output, shape index: {}]
  %s7 = sld [smem:[#allocation0]]
  $region57: #{tpu_custom_call.1} parent=0
    _
  %s9 = ssub.s32 1, %s7
  %s10 = scalar_select 0, %s9, %s7
  loop: start=0, step=1, limit=6
  $region2: #{tpu_custom_call.1} parent=0 // loop_pre_header
    _
  $region3: #{tpu_custom_call.1} parent=0 // loop_header
    %s12 = sphi 0, %s16
    %p13 = scmp.ge.s32.totalorder %s12, 6
    %s19 = sphi 0, %s31
    %s20 = sphi 0, %s27
    %s21 = sphi 0, %s19
    %s22 = sphi 0, %s20
    %s23 = sphi 0, %s21
    %s24 = sphi 0, %s22
    %s36 = sphi 0, %s38
    %s39 = sphi 0, %s36
    %s40 = sphi 0, %s39
    %s56 = sphi 0, %s40
    %s62 = sphi 0, %s64
    %s65 = sphi 0, %s62
    %s66 = sphi 0, %s65
    %s82 = sphi 0, %s66
    %s86 = sphi 0, %s86
    %s88 = sphi 0, %s86
    %s89 = sphi 0, %s88
    %s103 = sphi 0, %s89
    %s107 = sphi 0, %s107
    %s109 = sphi 0, %s107
    %s110 = sphi 0, %s109
    %s124 = sphi 0, %s110
    %s128 = sphi 0, %s128
    %s130 = sphi 0, %s128
    %s131 = sphi 0, %s130
    %s145 = sphi 0, %s131
    %s149 = sphi 0, %s149
    %s151 = sphi 0, %s149
    %s152 = sphi 0, %s151
    %s166 = sphi 0, %s152
    %s174 = sphi 0, %s176
    %s177 = sphi 0, %s174
    %s178 = sphi 0, %s177
    %s194 = sphi 0, %s178
  $region4: #{tpu_custom_call.1} parent=0 // loop_header_branch
    %15 = sbr.rel (%p13) target = $region8
  $region5: #{tpu_custom_call.1} parent=0 // loop_body
    %s17 = ssub.s32 %s12, 1
    %s18 = ssub.s32 %s12, 2
    %s25 = sadd.s32 1, %s20
    %p26 = scmp.ge.s32.totalorder %s25, 2
    %s27 = scalar_select %p26, 0, %s25
    %s28 = sadd.s32 1, %s19
    %s29 = scalar_select %p26, %s28, %s19
    %p30 = scmp.ge.s32.totalorder %s29, 2
    %s31 = scalar_select %p30, 0, %s29
    %s32 = ssub.s32 %s19, %s31
    %s33 = ssub.s32 %s20, %s27
    %s34 = sor.u32 %s32, %s33
    %p35 = scmp.eq.s32.totalorder %s34, 0
    %s37 = sadd.s32 %s36, 1
    %s38 = scalar_select %p35, %s36, %s37
    %p41 = pneg %p35
    %p42 = scmp.eq.s32.totalorder %s12, 3
    %p43 = por %p41, %p42
    %p44 = scmp.ne.s32.totalorder %s36, %s39
    %p45 = scmp.eq.s32.totalorder %s12, 0
    %p46 = por %p44, %p45
    %p47 = scmp.ne.s32.totalorder %s36, %s39
    %p48 = scmp.eq.s32.totalorder %s17, 3
    %p49 = por %p47, %p48
    %p50 = scmp.ne.s32.totalorder %s39, %s40
    %p51 = scmp.eq.s32.totalorder %s17, 0
    %p52 = por %p50, %p51
    %p53 = scmp.ne.s32.totalorder %s39, %s40
    %p54 = scmp.eq.s32.totalorder %s18, 3
    %p55 = por %p53, %p54
    %p57 = scmp.ne.s32.totalorder %s40, %s56
    %p58 = scmp.eq.s32.totalorder %s18, 0
    %p59 = por %p57, %p58
    %s60 = ssub.s32 %s20, %s27
    %p61 = scmp.eq.s32.totalorder %s60, 0
    %s63 = sadd.s32 %s62, 1
    %s64 = scalar_select %p61, %s62, %s63
    %p67 = pneg %p61
    %p68 = scmp.eq.s32.totalorder %s12, 3
    %p69 = por %p67, %p68
    %p70 = scmp.ne.s32.totalorder %s62, %s65
    %p71 = scmp.eq.s32.totalorder %s12, 0
    %p72 = por %p70, %p71
    %p73 = scmp.ne.s32.totalorder %s62, %s65
    %p74 = scmp.eq.s32.totalorder %s17, 3
    %p75 = por %p73, %p74
    %p76 = scmp.ne.s32.totalorder %s65, %s66
    %p77 = scmp.eq.s32.totalorder %s17, 0
    %p78 = por %p76, %p77
    %p79 = scmp.ne.s32.totalorder %s65, %s66
    %p80 = scmp.eq.s32.totalorder %s18, 3
    %p81 = por %p79, %p80
    %p83 = scmp.ne.s32.totalorder %s66, %s82
    %p84 = scmp.eq.s32.totalorder %s18, 0
    %p85 = por %p83, %p84
    %s87 = sadd.s32 %s86, 1
    %p90 = scmp.eq.s32.totalorder %s12, 3
    %p91 = scmp.ne.s32.totalorder %s86, %s88
    %p92 = scmp.eq.s32.totalorder %s12, 0
    %p93 = por %p91, %p92
    %p94 = scmp.ne.s32.totalorder %s86, %s88
    %p95 = scmp.eq.s32.totalorder %s17, 3
    %p96 = por %p94, %p95
    %p97 = scmp.ne.s32.totalorder %s88, %s89
    %p98 = scmp.eq.s32.totalorder %s17, 0
    %p99 = por %p97, %p98
    %p100 = scmp.ne.s32.totalorder %s88, %s89
    %p101 = scmp.eq.s32.totalorder %s18, 3
    %p102 = por %p100, %p101
    %p104 = scmp.ne.s32.totalorder %s89, %s103
    %p105 = scmp.eq.s32.totalorder %s18, 0
    %p106 = por %p104, %p105
    %s108 = sadd.s32 %s107, 1
    %p111 = scmp.eq.s32.totalorder %s12, 3
    %p112 = scmp.ne.s32.totalorder %s107, %s109
    %p113 = scmp.eq.s32.totalorder %s12, 0
    %p114 = por %p112, %p113
    %p115 = scmp.ne.s32.totalorder %s107, %s109
    %p116 = scmp.eq.s32.totalorder %s17, 3
    %p117 = por %p115, %p116
    %p118 = scmp.ne.s32.totalorder %s109, %s110
    %p119 = scmp.eq.s32.totalorder %s17, 0
    %p120 = por %p118, %p119
    %p121 = scmp.ne.s32.totalorder %s109, %s110
    %p122 = scmp.eq.s32.totalorder %s18, 3
    %p123 = por %p121, %p122
    %p125 = scmp.ne.s32.totalorder %s110, %s124
    %p126 = scmp.eq.s32.totalorder %s18, 0
    %p127 = por %p125, %p126
    %s129 = sadd.s32 %s128, 1
    %p132 = scmp.eq.s32.totalorder %s12, 3
    %p133 = scmp.ne.s32.totalorder %s128, %s130
    %p134 = scmp.eq.s32.totalorder %s12, 0
    %p135 = por %p133, %p134
    %p136 = scmp.ne.s32.totalorder %s128, %s130
    %p137 = scmp.eq.s32.totalorder %s17, 3
    %p138 = por %p136, %p137
    %p139 = scmp.ne.s32.totalorder %s130, %s131
    %p140 = scmp.eq.s32.totalorder %s17, 0
    %p141 = por %p139, %p140
    %p142 = scmp.ne.s32.totalorder %s130, %s131
    %p143 = scmp.eq.s32.totalorder %s18, 3
    %p144 = por %p142, %p143
    %p146 = scmp.ne.s32.totalorder %s131, %s145
    %p147 = scmp.eq.s32.totalorder %s18, 0
    %p148 = por %p146, %p147
    %s150 = sadd.s32 %s149, 1
    %p153 = scmp.eq.s32.totalorder %s12, 3
    %p154 = scmp.ne.s32.totalorder %s149, %s151
    %p155 = scmp.eq.s32.totalorder %s12, 0
    %p156 = por %p154, %p155
    %p157 = scmp.ne.s32.totalorder %s149, %s151
    %p158 = scmp.eq.s32.totalorder %s17, 3
    %p159 = por %p157, %p158
    %p160 = scmp.ne.s32.totalorder %s151, %s152
    %p161 = scmp.eq.s32.totalorder %s17, 0
    %p162 = por %p160, %p161
    %p163 = scmp.ne.s32.totalorder %s151, %s152
    %p164 = scmp.eq.s32.totalorder %s18, 3
    %p165 = por %p163, %p164
    %p167 = scmp.ne.s32.totalorder %s152, %s166
    %p168 = scmp.eq.s32.totalorder %s18, 0
    %p169 = por %p167, %p168
    %s170 = ssub.s32 %s19, %s31
    %s171 = ssub.s32 %s20, %s27
    %s172 = sor.u32 %s170, %s171
    %p173 = scmp.eq.s32.totalorder %s172, 0
    %s175 = sadd.s32 %s174, 1
    %s176 = scalar_select %p173, %s174, %s175
    %p179 = pneg %p173
    %p180 = scmp.eq.s32.totalorder %s12, 3
    %p181 = por %p179, %p180
    %p182 = scmp.ne.s32.totalorder %s174, %s177
    %p183 = scmp.eq.s32.totalorder %s12, 0
    %p184 = por %p182, %p183
    %p185 = scmp.ne.s32.totalorder %s174, %s177
    %p186 = scmp.eq.s32.totalorder %s17, 3
    %p187 = por %p185, %p186
    %p188 = scmp.ne.s32.totalorder %s177, %s178
    %p189 = scmp.eq.s32.totalorder %s17, 0
    %p190 = por %p188, %p189
    %p191 = scmp.ne.s32.totalorder %s177, %s178
    %p192 = scmp.eq.s32.totalorder %s18, 3
    %p193 = por %p191, %p192
    %p195 = scmp.ne.s32.totalorder %s178, %s194
    %p196 = scmp.eq.s32.totalorder %s18, 0
    %p197 = por %p195, %p196
    %p198 = scmp.le.s32.totalorder 1, %s12
    %p199 = scmp.lt.s32.totalorder %s12, 5
    %p200 = pnand %p198, %p199
    %p201 = pneg %p200
    // Predicated region
    $region9: #{tpu_custom_call.1} parent=5 // pred_check
      _
    $region10: #{tpu_custom_call.1} parent=5 // pred_check_branch
      %203 = sbr.rel (%p200) target = $region12
    $region11: #{tpu_custom_call.1} parent=5 // pred_region
      %s204 = ssub.s32 %s12, 1
      // Predicated region
      $region13: #{tpu_custom_call.1} parent=11 // pred_check
        %p205 = pneg %p99
      $region14: #{tpu_custom_call.1} parent=11 // pred_check_branch
        %207 = sbr.rel (%p205) target = $region16
      $region15: #{tpu_custom_call.1} parent=11 // pred_region
        _
      $region16: #{tpu_custom_call.1} parent=11 // pred_fallthru
        _
      // Predicated region
      $region17: #{tpu_custom_call.1} parent=11 // pred_check
        %p208 = pneg %p120
      $region18: #{tpu_custom_call.1} parent=11 // pred_check_branch
        %210 = sbr.rel (%p208) target = $region20
      $region19: #{tpu_custom_call.1} parent=11 // pred_region
        _
      $region20: #{tpu_custom_call.1} parent=11 // pred_fallthru
        _
      // Predicated region
      $region21: #{tpu_custom_call.1} parent=11 // pred_check
        %p211 = pneg %p141
      $region22: #{tpu_custom_call.1} parent=11 // pred_check_branch
        %213 = sbr.rel (%p211) target = $region24
      $region23: #{tpu_custom_call.1} parent=11 // pred_region
        _
      $region24: #{tpu_custom_call.1} parent=11 // pred_fallthru
        _
      // Predicated region
      $region25: #{tpu_custom_call.1} parent=11 // pred_check
        %p214 = pneg %p162
      $region26: #{tpu_custom_call.1} parent=11 // pred_check_branch
        %216 = sbr.rel (%p214) target = $region28
      $region27: #{tpu_custom_call.1} parent=11 // pred_region
        _
      $region28: #{tpu_custom_call.1} parent=11 // pred_fallthru
        _
    $region12: #{tpu_custom_call.1} parent=5 // pred_fallthru
      _
    %p217 = scmp.lt.s32.totalorder %s12, 4
    // Predicated region
    $region29: #{tpu_custom_call.1} parent=5 // pred_check
      %p218 = pneg %p217
    $region30: #{tpu_custom_call.1} parent=5 // pred_check_branch
      %220 = sbr.rel (%p218) target = $region32
    $region31: #{tpu_custom_call.1} parent=5 // pred_region
      // Predicated region
      $region33: #{tpu_custom_call.1} parent=31 // pred_check
        %p221 = pneg %p46
      $region34: #{tpu_custom_call.1} parent=31 // pred_check_branch
        %223 = sbr.rel (%p221) target = $region36
      $region35: #{tpu_custom_call.1} parent=31 // pred_region
        %p224 = scmp.lt.s32.totalorder %s19, 1
        %s225 = scalar_select %p224, %s19, 1
        %p226 = scmp.lt.s32.totalorder %s20, 1
        %s227 = scalar_select %p226, %s20, 1
        %s228 = smul.addr %s227, 28
        %s229 = smul.addr %s225, 56
        %s230 = sadd.s32 %s228, %s229
        %s231 = smul.addr %s230, 4
        %s232 = scalar_lea.vmem %s0, %s231
      $region36: #{tpu_custom_call.1} parent=31 // pred_fallthru
        _
      // Predicated region
      $region37: #{tpu_custom_call.1} parent=31 // pred_check
        %p233 = pneg %p72
      $region38: #{tpu_custom_call.1} parent=31 // pred_check_branch
        %235 = sbr.rel (%p233) target = $region40
      $region39: #{tpu_custom_call.1} parent=31 // pred_region
        %p236 = scmp.lt.s32.totalorder %s20, 1
        %s237 = scalar_select %p236, %s20, 1
        %s238 = smul.addr %s237, 23
        %s239 = smul.addr %s238, 8
        %s240 = scalar_lea.vmem %s1, %s239
      $region40: #{tpu_custom_call.1} parent=31 // pred_fallthru
        _
    $region32: #{tpu_custom_call.1} parent=5 // pred_fallthru
      _
    %p241 = scmp.le.s32.totalorder 1, %s12
    %p242 = scmp.lt.s32.totalorder %s12, 5
    %p243 = pnand %p241, %p242
    %p244 = pneg %p243
    // Predicated region
    $region41: #{tpu_custom_call.1} parent=5 // pred_check
      _
    $region42: #{tpu_custom_call.1} parent=5 // pred_check_branch
      %246 = sbr.rel (%p243) target = $region44
    $region43: #{tpu_custom_call.1} parent=5 // pred_region
      %s247 = ssub.s32 %s12, 1
      %p248 = scmp.lt.s32.totalorder %s21, 1
      %s249 = scalar_select %p248, %s21, 1
      %p250 = scmp.lt.s32.totalorder %s22, 1
      %s251 = scalar_select %p250, %s22, 1
      %s252 = smul.addr %s251, 28
      %s253 = smul.addr %s249, 56
      %s254 = sadd.s32 %s252, %s253
      %s255 = smul.addr %s254, 4
      %s256 = scalar_lea.vmem %s0, %s255
      %p257 = pneg %p52
      %p258 = pneg %p49
      %p259 = scmp.lt.s32.totalorder %s22, 1
      %s260 = scalar_select %p259, %s22, 1
      %s261 = smul.addr %s260, 23
      %s262 = smul.addr %s261, 8
      %s263 = scalar_lea.vmem %s1, %s262
      %p264 = pneg %p78
      %p265 = pneg %p75
      %p266 = pneg %p99
      %p267 = pneg %p96
      %p268 = pneg %p120
      %p269 = pneg %p117
      %p270 = pneg %p141
      %p271 = pneg %p138
      %p272 = pneg %p162
      %p273 = pneg %p159
      %p274 = pneg %p190
      %p275 = pneg %p187
      %p276 = scmp.lt.s32.totalorder %s21, 1
      %s277 = scalar_select %p276, %s21, 1
      %p278 = scmp.lt.s32.totalorder %s22, 1
      %s279 = scalar_select %p278, %s22, 1
      %s280 = smul.addr %s279, 18
      %s281 = smul.addr %s277, 36
      %s282 = sadd.s32 %s280, %s281
      %s283 = smul.addr %s282, 8
      %s284 = scalar_lea.vmem %s6, %s283
      %p285 = scmp.lt.s32.totalorder %s21, 1
      %s286 = scalar_select %p285, %s21, 1
      %p287 = scmp.lt.s32.totalorder %s22, 1
      %s288 = scalar_select %p287, %s22, 1
      %s289 = smul.addr %s288, 28
      %s290 = smul.addr %s286, 56
      %s291 = sadd.s32 %s289, %s290
      %s292 = smul.addr %s291, 4
      %s293 = scalar_lea.vmem %s0, %s292
      %p294 = scmp.lt.s32.totalorder %s22, 1
      %s295 = scalar_select %p294, %s22, 1
      %s296 = smul.addr %s295, 23
      %s297 = smul.addr %s296, 8
      %s298 = scalar_lea.vmem %s1, %s297
      %p299 = scmp.lt.s32.totalorder %s21, 1
      %s300 = scalar_select %p299, %s21, 1
      %p301 = scmp.lt.s32.totalorder %s22, 1
      %s302 = scalar_select %p301, %s22, 1
      %s303 = smul.addr %s302, 18
      %s304 = smul.addr %s300, 36
      %s305 = sadd.s32 %s303, %s304
      %s306 = smul.addr %s305, 8
      %s307 = scalar_lea.vmem %s6, %s306
      %v309 = vld [vmem:[%s293] sm:$0xf]
      %v310 = vld [vmem:[%s293 + $0x4] sm:$0xf]
      %v311 = vld [vmem:[%s293 + $0x8] sm:$0xf]
      %v312 = vld [vmem:[%s293 + $0xc] sm:$0xf]
      %v313 = vld [vmem:[%s293 + $0x10] sm:$0xf]
      %v314 = vld [vmem:[%s293 + $0x14] sm:$0xf]
      %v315 = vld [vmem:[%s293 + $0x18] sm:$0xf]
      %v316 = vld [vmem:[%s293 + $0x1c] sm:$0xf]
      %v317 = vld [vmem:[%s293 + $0x20] sm:$0xf]
      %v318 = vld [vmem:[%s293 + $0x24] sm:$0xf]
      %v319 = vld [vmem:[%s293 + $0x28] sm:$0xf]
      %v320 = vld [vmem:[%s293 + $0x2c] sm:$0xf]
      %v321 = vld [vmem:[%s293 + $0x30] sm:$0xf]
      %v322 = vld [vmem:[%s293 + $0x34] sm:$0xf]
      %v323 = vld [vmem:[%s293 + $0x38] sm:$0xf]
      %v324 = vld [vmem:[%s293 + $0x3c] sm:$0xf]
      %v325 = vld [vmem:[%s293 + $0x40] sm:$0xf]
      %v326 = vld [vmem:[%s293 + $0x44] sm:$0xf]
      %v327 = vld [vmem:[%s293 + $0x48] sm:$0xf]
      %v328 = vld [vmem:[%s293 + $0x4c] sm:$0xf]
      %v329 = vld [vmem:[%s293 + $0x50] sm:$0xf]
      %v330 = vld [vmem:[%s293 + $0x54] sm:$0xf]
      %v331 = vld [vmem:[%s293 + $0x58] sm:$0xf]
      %v332 = vld [vmem:[%s293 + $0x5c] sm:$0xf]
      %v333 = vld [vmem:[%s293 + $0x60] sm:$0xf]
      %v334 = vld [vmem:[%s293 + $0x64] sm:$0xf]
      %v335 = vld [vmem:[%s293 + $0x68] sm:$0xf]
      %v336 = vld [vmem:[%s293 + $0x6c] sm:$0x1]
      %v337 = vunpack.c.l.bf16 %v309
      %v338 = vunpack.c.l.bf16 %v310
      %v339 = vunpack.c.l.bf16 %v311
      %v340 = vunpack.c.l.bf16 %v312
      %v341 = vunpack.c.l.bf16 %v313
      %v342 = vunpack.c.l.bf16 %v314
      %v343 = vunpack.c.l.bf16 %v315
      %v344 = vunpack.c.l.bf16 %v316
      %v345 = vunpack.c.l.bf16 %v317
      %v346 = vunpack.c.l.bf16 %v318
      %v347 = vunpack.c.l.bf16 %v319
      %v348 = vunpack.c.l.bf16 %v320
      %v349 = vunpack.c.l.bf16 %v321
      %v350 = vunpack.c.l.bf16 %v322
      %v351 = vunpack.c.l.bf16 %v323
      %v352 = vunpack.c.l.bf16 %v324
      %v353 = vunpack.c.l.bf16 %v325
      %v354 = vunpack.c.l.bf16 %v326
      %v355 = vunpack.c.l.bf16 %v327
      %v356 = vunpack.c.l.bf16 %v328
      %v357 = vunpack.c.l.bf16 %v329
      %v358 = vunpack.c.l.bf16 %v330
      %v359 = vunpack.c.l.bf16 %v331
      %v360 = vunpack.c.l.bf16 %v332
      %v361 = vunpack.c.l.bf16 %v333
      %v362 = vunpack.c.l.bf16 %v334
      %v363 = vunpack.c.l.bf16 %v335
      %v364 = vunpack.c.l.bf16 %v336
      %vm388 = vcmask 1046528
      %v389 = vrot.slane %v337, 1
      %v390 = vrot.slane %v338, 1
      %v391 = vsel %vm388, %v389, %v390
      %v392 = vrot.slane %v339, 1
      %v393 = vsel %vm388, %v390, %v392
      %v394 = vrot.slane %v340, 1
      %v395 = vsel %vm388, %v392, %v394
      %v396 = vrot.slane %v341, 1
      %v397 = vsel %vm388, %v394, %v396
      %v398 = vrot.slane %v342, 1
      %v399 = vsel %vm388, %v396, %v398
      %v400 = vrot.slane %v343, 1
      %v401 = vsel %vm388, %v398, %v400
      %v402 = vrot.slane %v344, 1
      %v403 = vsel %vm388, %v400, %v402
      %v404 = vrot.slane %v345, 1
      %v405 = vsel %vm388, %v402, %v404
      %v406 = vrot.slane %v346, 1
      %v407 = vsel %vm388, %v404, %v406
      %v408 = vrot.slane %v347, 1
      %v409 = vsel %vm388, %v406, %v408
      %v410 = vrot.slane %v348, 1
      %v411 = vsel %vm388, %v408, %v410
      %v412 = vrot.slane %v349, 1
      %v413 = vsel %vm388, %v410, %v412
      %v414 = vrot.slane %v350, 1
      %v415 = vsel %vm388, %v412, %v414
      %v416 = vrot.slane %v351, 1
      %v417 = vsel %vm388, %v414, %v416
      %v418 = vrot.slane %v352, 1
      %v419 = vsel %vm388, %v416, %v418
      %v420 = vrot.slane %v353, 1
      %v421 = vsel %vm388, %v418, %v420
      %v422 = vrot.slane %v354, 1
      %v423 = vsel %vm388, %v420, %v422
      %v424 = vrot.slane %v355, 1
      %v425 = vsel %vm388, %v422, %v424
      %v426 = vrot.slane %v356, 1
      %v427 = vsel %vm388, %v424, %v426
      %v428 = vrot.slane %v357, 1
      %v429 = vsel %vm388, %v426, %v428
      %v430 = vrot.slane %v358, 1
      %v431 = vsel %vm388, %v428, %v430
      %v432 = vrot.slane %v359, 1
      %v433 = vsel %vm388, %v430, %v432
      %434 = vrot.lane.b32.xlu0 %v391, 8
      %v435 = vpop.permute.xlu0 %434
      %436 = vrot.lane.b32.xlu0 %v393, 8
      %v437 = vpop.permute.xlu0 %436
      %438 = vrot.lane.b32.xlu0 %v395, 8
      %v439 = vpop.permute.xlu0 %438
      %440 = vrot.lane.b32.xlu0 %v397, 8
      %v441 = vpop.permute.xlu0 %440
      %442 = vrot.lane.b32.xlu0 %v399, 8
      %v443 = vpop.permute.xlu0 %442
      %444 = vrot.lane.b32.xlu0 %v401, 8
      %v445 = vpop.permute.xlu0 %444
      %446 = vrot.lane.b32.xlu0 %v403, 8
      %v447 = vpop.permute.xlu0 %446
      %448 = vrot.lane.b32.xlu0 %v405, 8
      %v449 = vpop.permute.xlu0 %448
      %450 = vrot.lane.b32.xlu0 %v407, 8
      %v451 = vpop.permute.xlu0 %450
      %452 = vrot.lane.b32.xlu0 %v409, 8
      %v453 = vpop.permute.xlu0 %452
      %454 = vrot.lane.b32.xlu0 %v411, 8
      %v455 = vpop.permute.xlu0 %454
      %456 = vrot.lane.b32.xlu0 %v413, 8
      %v457 = vpop.permute.xlu0 %456
      %458 = vrot.lane.b32.xlu0 %v415, 8
      %v459 = vpop.permute.xlu0 %458
      %460 = vrot.lane.b32.xlu0 %v417, 8
      %v461 = vpop.permute.xlu0 %460
      %462 = vrot.lane.b32.xlu0 %v419, 8
      %v463 = vpop.permute.xlu0 %462
      %464 = vrot.lane.b32.xlu0 %v421, 8
      %v465 = vpop.permute.xlu0 %464
      %466 = vrot.lane.b32.xlu0 %v423, 8
      %v467 = vpop.permute.xlu0 %466
      %468 = vrot.lane.b32.xlu0 %v425, 8
      %v469 = vpop.permute.xlu0 %468
      %470 = vrot.lane.b32.xlu0 %v427, 8
      %v471 = vpop.permute.xlu0 %470
      %472 = vrot.lane.b32.xlu0 %v429, 8
      %v473 = vpop.permute.xlu0 %472
      %474 = vrot.lane.b32.xlu0 %v431, 8
      %v475 = vpop.permute.xlu0 %474
      %476 = vrot.lane.b32.xlu0 %v433, 8
      %v477 = vpop.permute.xlu0 %476
      %478 = vrot.lane.b32.xlu0 %v432, 8
      %v479 = vpop.permute.xlu0 %478
      %vm503 = vcmask 1045504
      %v504 = vrot.slane %v337, 2
      %v505 = vrot.slane %v338, 2
      %v506 = vsel %vm503, %v504, %v505
      %v507 = vrot.slane %v339, 2
      %v508 = vsel %vm503, %v505, %v507
      %v509 = vrot.slane %v340, 2
      %v510 = vsel %vm503, %v507, %v509
      %v511 = vrot.slane %v341, 2
      %v512 = vsel %vm503, %v509, %v511
      %v513 = vrot.slane %v342, 2
      %v514 = vsel %vm503, %v511, %v513
      %v515 = vrot.slane %v343, 2
      %v516 = vsel %vm503, %v513, %v515
      %v517 = vrot.slane %v344, 2
      %v518 = vsel %vm503, %v515, %v517
      %v519 = vrot.slane %v345, 2
      %v520 = vsel %vm503, %v517, %v519
      %v521 = vrot.slane %v346, 2
      %v522 = vsel %vm503, %v519, %v521
      %v523 = vrot.slane %v347, 2
      %v524 = vsel %vm503, %v521, %v523
      %v525 = vrot.slane %v348, 2
      %v526 = vsel %vm503, %v523, %v525
      %v527 = vrot.slane %v349, 2
      %v528 = vsel %vm503, %v525, %v527
      %v529 = vrot.slane %v350, 2
      %v530 = vsel %vm503, %v527, %v529
      %v531 = vrot.slane %v351, 2
      %v532 = vsel %vm503, %v529, %v531
      %v533 = vrot.slane %v352, 2
      %v534 = vsel %vm503, %v531, %v533
      %v535 = vrot.slane %v353, 2
      %v536 = vsel %vm503, %v533, %v535
      %v537 = vrot.slane %v354, 2
      %v538 = vsel %vm503, %v535, %v537
      %v539 = vrot.slane %v355, 2
      %v540 = vsel %vm503, %v537, %v539
      %v541 = vrot.slane %v356, 2
      %v542 = vsel %vm503, %v539, %v541
      %v543 = vrot.slane %v357, 2
      %v544 = vsel %vm503, %v541, %v543
      %v545 = vrot.slane %v358, 2
      %v546 = vsel %vm503, %v543, %v545
      %v547 = vrot.slane %v359, 2
      %v548 = vsel %vm503, %v545, %v547
      %549 = vrot.lane.b32.xlu0 %v506, 16
      %v550 = vpop.permute.xlu0 %549
      %551 = vrot.lane.b32.xlu0 %v508, 16
      %v552 = vpop.permute.xlu0 %551
      %553 = vrot.lane.b32.xlu0 %v510, 16
      %v554 = vpop.permute.xlu0 %553
      %555 = vrot.lane.b32.xlu0 %v512, 16
      %v556 = vpop.permute.xlu0 %555
      %557 = vrot.lane.b32.xlu0 %v514, 16
      %v558 = vpop.permute.xlu0 %557
      %559 = vrot.lane.b32.xlu0 %v516, 16
      %v560 = vpop.permute.xlu0 %559
      %561 = vrot.lane.b32.xlu0 %v518, 16
      %v562 = vpop.permute.xlu0 %561
      %563 = vrot.lane.b32.xlu0 %v520, 16
      %v564 = vpop.permute.xlu0 %563
      %565 = vrot.lane.b32.xlu0 %v522, 16
      %v566 = vpop.permute.xlu0 %565
      %567 = vrot.lane.b32.xlu0 %v524, 16
      %v568 = vpop.permute.xlu0 %567
      %569 = vrot.lane.b32.xlu0 %v526, 16
      %v570 = vpop.permute.xlu0 %569
      %571 = vrot.lane.b32.xlu0 %v528, 16
      %v572 = vpop.permute.xlu0 %571
      %573 = vrot.lane.b32.xlu0 %v530, 16
      %v574 = vpop.permute.xlu0 %573
      %575 = vrot.lane.b32.xlu0 %v532, 16
      %v576 = vpop.permute.xlu0 %575
      %577 = vrot.lane.b32.xlu0 %v534, 16
      %v578 = vpop.permute.xlu0 %577
      %579 = vrot.lane.b32.xlu0 %v536, 16
      %v580 = vpop.permute.xlu0 %579
      %581 = vrot.lane.b32.xlu0 %v538, 16
      %v582 = vpop.permute.xlu0 %581
      %583 = vrot.lane.b32.xlu0 %v540, 16
      %v584 = vpop.permute.xlu0 %583
      %585 = vrot.lane.b32.xlu0 %v542, 16
      %v586 = vpop.permute.xlu0 %585
      %587 = vrot.lane.b32.xlu0 %v544, 16
      %v588 = vpop.permute.xlu0 %587
      %589 = vrot.lane.b32.xlu0 %v546, 16
      %v590 = vpop.permute.xlu0 %589
      %591 = vrot.lane.b32.xlu0 %v548, 16
      %v592 = vpop.permute.xlu0 %591
      %593 = vrot.lane.b32.xlu0 %v547, 16
      %v594 = vpop.permute.xlu0 %593
      %v620 = vrot.slane %v360, 2
      %v621 = vsel %vm503, %v547, %v620
      %v622 = vrot.slane %v361, 2
      %v623 = vsel %vm503, %v620, %v622
      %624 = vrot.lane.b32.xlu0 %v510, 24
      %v625 = vpop.permute.xlu0 %624
      %626 = vrot.lane.b32.xlu0 %v512, 24
      %v627 = vpop.permute.xlu0 %626
      %628 = vrot.lane.b32.xlu0 %v514, 24
      %v629 = vpop.permute.xlu0 %628
      %630 = vrot.lane.b32.xlu0 %v516, 24
      %v631 = vpop.permute.xlu0 %630
      %632 = vrot.lane.b32.xlu0 %v518, 24
      %v633 = vpop.permute.xlu0 %632
      %634 = vrot.lane.b32.xlu0 %v520, 24
      %v635 = vpop.permute.xlu0 %634
      %636 = vrot.lane.b32.xlu0 %v522, 24
      %v637 = vpop.permute.xlu0 %636
      %638 = vrot.lane.b32.xlu0 %v524, 24
      %v639 = vpop.permute.xlu0 %638
      %640 = vrot.lane.b32.xlu0 %v526, 24
      %v641 = vpop.permute.xlu0 %640
      %642 = vrot.lane.b32.xlu0 %v528, 24
      %v643 = vpop.permute.xlu0 %642
      %644 = vrot.lane.b32.xlu0 %v530, 24
      %v645 = vpop.permute.xlu0 %644
      %646 = vrot.lane.b32.xlu0 %v532, 24
      %v647 = vpop.permute.xlu0 %646
      %648 = vrot.lane.b32.xlu0 %v534, 24
      %v649 = vpop.permute.xlu0 %648
      %650 = vrot.lane.b32.xlu0 %v536, 24
      %v651 = vpop.permute.xlu0 %650
      %652 = vrot.lane.b32.xlu0 %v538, 24
      %v653 = vpop.permute.xlu0 %652
      %654 = vrot.lane.b32.xlu0 %v540, 24
      %v655 = vpop.permute.xlu0 %654
      %656 = vrot.lane.b32.xlu0 %v542, 24
      %v657 = vpop.permute.xlu0 %656
      %658 = vrot.lane.b32.xlu0 %v544, 24
      %v659 = vpop.permute.xlu0 %658
      %660 = vrot.lane.b32.xlu0 %v546, 24
      %v661 = vpop.permute.xlu0 %660
      %662 = vrot.lane.b32.xlu0 %v548, 24
      %v663 = vpop.permute.xlu0 %662
      %664 = vrot.lane.b32.xlu0 %v621, 24
      %v665 = vpop.permute.xlu0 %664
      %666 = vrot.lane.b32.xlu0 %v623, 24
      %v667 = vpop.permute.xlu0 %666
      %668 = vrot.lane.b32.xlu0 %v622, 24
      %v669 = vpop.permute.xlu0 %668
      %vm693 = vcmask 1044480
      %v694 = vrot.slane %v339, 3
      %v695 = vrot.slane %v340, 3
      %v696 = vsel %vm693, %v694, %v695
      %v697 = vrot.slane %v341, 3
      %v698 = vsel %vm693, %v695, %v697
      %v699 = vrot.slane %v342, 3
      %v700 = vsel %vm693, %v697, %v699
      %v701 = vrot.slane %v343, 3
      %v702 = vsel %vm693, %v699, %v701
      %v703 = vrot.slane %v344, 3
      %v704 = vsel %vm693, %v701, %v703
      %v705 = vrot.slane %v345, 3
      %v706 = vsel %vm693, %v703, %v705
      %v707 = vrot.slane %v346, 3
      %v708 = vsel %vm693, %v705, %v707
      %v709 = vrot.slane %v347, 3
      %v710 = vsel %vm693, %v707, %v709
      %v711 = vrot.slane %v348, 3
      %v712 = vsel %vm693, %v709, %v711
      %v713 = vrot.slane %v349, 3
      %v714 = vsel %vm693, %v711, %v713
      %v715 = vrot.slane %v350, 3
      %v716 = vsel %vm693, %v713, %v715
      %v717 = vrot.slane %v351, 3
      %v718 = vsel %vm693, %v715, %v717
      %v719 = vrot.slane %v352, 3
      %v720 = vsel %vm693, %v717, %v719
      %v721 = vrot.slane %v353, 3
      %v722 = vsel %vm693, %v719, %v721
      %v723 = vrot.slane %v354, 3
      %v724 = vsel %vm693, %v721, %v723
      %v725 = vrot.slane %v355, 3
      %v726 = vsel %vm693, %v723, %v725
      %v727 = vrot.slane %v356, 3
      %v728 = vsel %vm693, %v725, %v727
      %v729 = vrot.slane %v357, 3
      %v730 = vsel %vm693, %v727, %v729
      %v731 = vrot.slane %v358, 3
      %v732 = vsel %vm693, %v729, %v731
      %v733 = vrot.slane %v359, 3
      %v734 = vsel %vm693, %v731, %v733
      %v735 = vrot.slane %v360, 3
      %v736 = vsel %vm693, %v733, %v735
      %v737 = vrot.slane %v361, 3
      %v738 = vsel %vm693, %v735, %v737
      %739 = vrot.lane.b32.xlu0 %v696, 32
      %v740 = vpop.permute.xlu0 %739
      %741 = vrot.lane.b32.xlu0 %v698, 32
      %v742 = vpop.permute.xlu0 %741
      %743 = vrot.lane.b32.xlu0 %v700, 32
      %v744 = vpop.permute.xlu0 %743
      %745 = vrot.lane.b32.xlu0 %v702, 32
      %v746 = vpop.permute.xlu0 %745
      %747 = vrot.lane.b32.xlu0 %v704, 32
      %v748 = vpop.permute.xlu0 %747
      %749 = vrot.lane.b32.xlu0 %v706, 32
      %v750 = vpop.permute.xlu0 %749
      %751 = vrot.lane.b32.xlu0 %v708, 32
      %v752 = vpop.permute.xlu0 %751
      %753 = vrot.lane.b32.xlu0 %v710, 32
      %v754 = vpop.permute.xlu0 %753
      %755 = vrot.lane.b32.xlu0 %v712, 32
      %v756 = vpop.permute.xlu0 %755
      %757 = vrot.lane.b32.xlu0 %v714, 32
      %v758 = vpop.permute.xlu0 %757
      %759 = vrot.lane.b32.xlu0 %v716, 32
      %v760 = vpop.permute.xlu0 %759
      %761 = vrot.lane.b32.xlu0 %v718, 32
      %v762 = vpop.permute.xlu0 %761
      %763 = vrot.lane.b32.xlu0 %v720, 32
      %v764 = vpop.permute.xlu0 %763
      %765 = vrot.lane.b32.xlu0 %v722, 32
      %v766 = vpop.permute.xlu0 %765
      %767 = vrot.lane.b32.xlu0 %v724, 32
      %v768 = vpop.permute.xlu0 %767
      %769 = vrot.lane.b32.xlu0 %v726, 32
      %v770 = vpop.permute.xlu0 %769
      %771 = vrot.lane.b32.xlu0 %v728, 32
      %v772 = vpop.permute.xlu0 %771
      %773 = vrot.lane.b32.xlu0 %v730, 32
      %v774 = vpop.permute.xlu0 %773
      %775 = vrot.lane.b32.xlu0 %v732, 32
      %v776 = vpop.permute.xlu0 %775
      %777 = vrot.lane.b32.xlu0 %v734, 32
      %v778 = vpop.permute.xlu0 %777
      %779 = vrot.lane.b32.xlu0 %v736, 32
      %v780 = vpop.permute.xlu0 %779
      %781 = vrot.lane.b32.xlu0 %v738, 32
      %v782 = vpop.permute.xlu0 %781
      %783 = vrot.lane.b32.xlu0 %v737, 32
      %v784 = vpop.permute.xlu0 %783
      %vm808 = vcmask 1043456
      %v809 = vrot.slane %v339, 4
      %v810 = vrot.slane %v340, 4
      %v811 = vsel %vm808, %v809, %v810
      %v812 = vrot.slane %v341, 4
      %v813 = vsel %vm808, %v810, %v812
      %v814 = vrot.slane %v342, 4
      %v815 = vsel %vm808, %v812, %v814
      %v816 = vrot.slane %v343, 4
      %v817 = vsel %vm808, %v814, %v816
      %v818 = vrot.slane %v344, 4
      %v819 = vsel %vm808, %v816, %v818
      %v820 = vrot.slane %v345, 4
      %v821 = vsel %vm808, %v818, %v820
      %v822 = vrot.slane %v346, 4
      %v823 = vsel %vm808, %v820, %v822
      %v824 = vrot.slane %v347, 4
      %v825 = vsel %vm808, %v822, %v824
      %v826 = vrot.slane %v348, 4
      %v827 = vsel %vm808, %v824, %v826
      %v828 = vrot.slane %v349, 4
      %v829 = vsel %vm808, %v826, %v828
      %v830 = vrot.slane %v350, 4
      %v831 = vsel %vm808, %v828, %v830
      %v832 = vrot.slane %v351, 4
      %v833 = vsel %vm808, %v830, %v832
      %v834 = vrot.slane %v352, 4
      %v835 = vsel %vm808, %v832, %v834
      %v836 = vrot.slane %v353, 4
      %v837 = vsel %vm808, %v834, %v836
      %v838 = vrot.slane %v354, 4
      %v839 = vsel %vm808, %v836, %v838
      %v840 = vrot.slane %v355, 4
      %v841 = vsel %vm808, %v838, %v840
      %v842 = vrot.slane %v356, 4
      %v843 = vsel %vm808, %v840, %v842
      %v844 = vrot.slane %v357, 4
      %v845 = vsel %vm808, %v842, %v844
      %v846 = vrot.slane %v358, 4
      %v847 = vsel %vm808, %v844, %v846
      %v848 = vrot.slane %v359, 4
      %v849 = vsel %vm808, %v846, %v848
      %v850 = vrot.slane %v360, 4
      %v851 = vsel %vm808, %v848, %v850
      %v852 = vrot.slane %v361, 4
      %v853 = vsel %vm808, %v850, %v852
      %854 = vrot.lane.b32.xlu0 %v811, 40
      %v855 = vpop.permute.xlu0 %854
      %856 = vrot.lane.b32.xlu0 %v813, 40
      %v857 = vpop.permute.xlu0 %856
      %858 = vrot.lane.b32.xlu0 %v815, 40
      %v859 = vpop.permute.xlu0 %858
      %860 = vrot.lane.b32.xlu0 %v817, 40
      %v861 = vpop.permute.xlu0 %860
      %862 = vrot.lane.b32.xlu0 %v819, 40
      %v863 = vpop.permute.xlu0 %862
      %864 = vrot.lane.b32.xlu0 %v821, 40
      %v865 = vpop.permute.xlu0 %864
      %866 = vrot.lane.b32.xlu0 %v823, 40
      %v867 = vpop.permute.xlu0 %866
      %868 = vrot.lane.b32.xlu0 %v825, 40
      %v869 = vpop.permute.xlu0 %868
      %870 = vrot.lane.b32.xlu0 %v827, 40
      %v871 = vpop.permute.xlu0 %870
      %872 = vrot.lane.b32.xlu0 %v829, 40
      %v873 = vpop.permute.xlu0 %872
      %874 = vrot.lane.b32.xlu0 %v831, 40
      %v875 = vpop.permute.xlu0 %874
      %876 = vrot.lane.b32.xlu0 %v833, 40
      %v877 = vpop.permute.xlu0 %876
      %878 = vrot.lane.b32.xlu0 %v835, 40
      %v879 = vpop.permute.xlu0 %878
      %880 = vrot.lane.b32.xlu0 %v837, 40
      %v881 = vpop.permute.xlu0 %880
      %882 = vrot.lane.b32.xlu0 %v839, 40
      %v883 = vpop.permute.xlu0 %882
      %884 = vrot.lane.b32.xlu0 %v841, 40
      %v885 = vpop.permute.xlu0 %884
      %886 = vrot.lane.b32.xlu0 %v843, 40
      %v887 = vpop.permute.xlu0 %886
      %888 = vrot.lane.b32.xlu0 %v845, 40
      %v889 = vpop.permute.xlu0 %888
      %890 = vrot.lane.b32.xlu0 %v847, 40
      %v891 = vpop.permute.xlu0 %890
      %892 = vrot.lane.b32.xlu0 %v849, 40
      %v893 = vpop.permute.xlu0 %892
      %894 = vrot.lane.b32.xlu0 %v851, 40
      %v895 = vpop.permute.xlu0 %894
      %896 = vrot.lane.b32.xlu0 %v853, 40
      %v897 = vpop.permute.xlu0 %896
      %898 = vrot.lane.b32.xlu0 %v852, 40
      %v899 = vpop.permute.xlu0 %898
      %v925 = vrot.slane %v362, 4
      %v926 = vsel %vm808, %v852, %v925
      %v927 = vrot.slane %v363, 4
      %v928 = vsel %vm808, %v925, %v927
      %929 = vrot.lane.b32.xlu0 %v815, 48
      %v930 = vpop.permute.xlu0 %929
      %931 = vrot.lane.b32.xlu0 %v817, 48
      %v932 = vpop.permute.xlu0 %931
      %933 = vrot.lane.b32.xlu0 %v819, 48
      %v934 = vpop.permute.xlu0 %933
      %935 = vrot.lane.b32.xlu0 %v821, 48
      %v936 = vpop.permute.xlu0 %935
      %937 = vrot.lane.b32.xlu0 %v823, 48
      %v938 = vpop.permute.xlu0 %937
      %939 = vrot.lane.b32.xlu0 %v825, 48
      %v940 = vpop.permute.xlu0 %939
      %941 = vrot.lane.b32.xlu0 %v827, 48
      %v942 = vpop.permute.xlu0 %941
      %943 = vrot.lane.b32.xlu0 %v829, 48
      %v944 = vpop.permute.xlu0 %943
      %945 = vrot.lane.b32.xlu0 %v831, 48
      %v946 = vpop.permute.xlu0 %945
      %947 = vrot.lane.b32.xlu0 %v833, 48
      %v948 = vpop.permute.xlu0 %947
      %949 = vrot.lane.b32.xlu0 %v835, 48
      %v950 = vpop.permute.xlu0 %949
      %951 = vrot.lane.b32.xlu0 %v837, 48
      %v952 = vpop.permute.xlu0 %951
      %953 = vrot.lane.b32.xlu0 %v839, 48
      %v954 = vpop.permute.xlu0 %953
      %955 = vrot.lane.b32.xlu0 %v841, 48
      %v956 = vpop.permute.xlu0 %955
      %957 = vrot.lane.b32.xlu0 %v843, 48
      %v958 = vpop.permute.xlu0 %957
      %959 = vrot.lane.b32.xlu0 %v845, 48
      %v960 = vpop.permute.xlu0 %959
      %961 = vrot.lane.b32.xlu0 %v847, 48
      %v962 = vpop.permute.xlu0 %961
      %963 = vrot.lane.b32.xlu0 %v849, 48
      %v964 = vpop.permute.xlu0 %963
      %965 = vrot.lane.b32.xlu0 %v851, 48
      %v966 = vpop.permute.xlu0 %965
      %967 = vrot.lane.b32.xlu0 %v853, 48
      %v968 = vpop.permute.xlu0 %967
      %969 = vrot.lane.b32.xlu0 %v926, 48
      %v970 = vpop.permute.xlu0 %969
      %971 = vrot.lane.b32.xlu0 %v928, 48
      %v972 = vpop.permute.xlu0 %971
      %973 = vrot.lane.b32.xlu0 %v927, 48
      %v974 = vpop.permute.xlu0 %973
      %vm999 = vcmask 1042432
      %v1000 = vrot.slane %v341, 5
      %v1001 = vrot.slane %v342, 5
      %v1002 = vsel %vm999, %v1000, %v1001
      %v1003 = vrot.slane %v343, 5
      %v1004 = vsel %vm999, %v1001, %v1003
      %v1005 = vrot.slane %v344, 5
      %v1006 = vsel %vm999, %v1003, %v1005
      %v1007 = vrot.slane %v345, 5
      %v1008 = vsel %vm999, %v1005, %v1007
      %v1009 = vrot.slane %v346, 5
      %v1010 = vsel %vm999, %v1007, %v1009
      %v1011 = vrot.slane %v347, 5
      %v1012 = vsel %vm999, %v1009, %v1011
      %v1013 = vrot.slane %v348, 5
      %v1014 = vsel %vm999, %v1011, %v1013
      %v1015 = vrot.slane %v349, 5
      %v1016 = vsel %vm999, %v1013, %v1015
      %v1017 = vrot.slane %v350, 5
      %v1018 = vsel %vm999, %v1015, %v1017
      %v1019 = vrot.slane %v351, 5
      %v1020 = vsel %vm999, %v1017, %v1019
      %v1021 = vrot.slane %v352, 5
      %v1022 = vsel %vm999, %v1019, %v1021
      %v1023 = vrot.slane %v353, 5
      %v1024 = vsel %vm999, %v1021, %v1023
      %v1025 = vrot.slane %v354, 5
      %v1026 = vsel %vm999, %v1023, %v1025
      %v1027 = vrot.slane %v355, 5
      %v1028 = vsel %vm999, %v1025, %v1027
      %v1029 = vrot.slane %v356, 5
      %v1030 = vsel %vm999, %v1027, %v1029
      %v1031 = vrot.slane %v357, 5
      %v1032 = vsel %vm999, %v1029, %v1031
      %v1033 = vrot.slane %v358, 5
      %v1034 = vsel %vm999, %v1031, %v1033
      %v1035 = vrot.slane %v359, 5
      %v1036 = vsel %vm999, %v1033, %v1035
      %v1037 = vrot.slane %v360, 5
      %v1038 = vsel %vm999, %v1035, %v1037
      %v1039 = vrot.slane %v361, 5
      %v1040 = vsel %vm999, %v1037, %v1039
      %v1041 = vrot.slane %v362, 5
      %v1042 = vsel %vm999, %v1039, %v1041
      %v1043 = vrot.slane %v363, 5
      %v1044 = vsel %vm999, %v1041, %v1043
      %v1045 = vrot.slane %v364, 5
      %v1046 = vsel %vm999, %v1043, %v1045
      %1047 = vrot.lane.b32.xlu0 %v1002, 56
      %v1048 = vpop.permute.xlu0 %1047
      %1049 = vrot.lane.b32.xlu0 %v1004, 56
      %v1050 = vpop.permute.xlu0 %1049
      %1051 = vrot.lane.b32.xlu0 %v1006, 56
      %v1052 = vpop.permute.xlu0 %1051
      %1053 = vrot.lane.b32.xlu0 %v1008, 56
      %v1054 = vpop.permute.xlu0 %1053
      %1055 = vrot.lane.b32.xlu0 %v1010, 56
      %v1056 = vpop.permute.xlu0 %1055
      %1057 = vrot.lane.b32.xlu0 %v1012, 56
      %v1058 = vpop.permute.xlu0 %1057
      %1059 = vrot.lane.b32.xlu0 %v1014, 56
      %v1060 = vpop.permute.xlu0 %1059
      %1061 = vrot.lane.b32.xlu0 %v1016, 56
      %v1062 = vpop.permute.xlu0 %1061
      %1063 = vrot.lane.b32.xlu0 %v1018, 56
      %v1064 = vpop.permute.xlu0 %1063
      %1065 = vrot.lane.b32.xlu0 %v1020, 56
      %v1066 = vpop.permute.xlu0 %1065
      %1067 = vrot.lane.b32.xlu0 %v1022, 56
      %v1068 = vpop.permute.xlu0 %1067
      %1069 = vrot.lane.b32.xlu0 %v1024, 56
      %v1070 = vpop.permute.xlu0 %1069
      %1071 = vrot.lane.b32.xlu0 %v1026, 56
      %v1072 = vpop.permute.xlu0 %1071
      %1073 = vrot.lane.b32.xlu0 %v1028, 56
      %v1074 = vpop.permute.xlu0 %1073
      %1075 = vrot.lane.b32.xlu0 %v1030, 56
      %v1076 = vpop.permute.xlu0 %1075
      %1077 = vrot.lane.b32.xlu0 %v1032, 56
      %v1078 = vpop.permute.xlu0 %1077
      %1079 = vrot.lane.b32.xlu0 %v1034, 56
      %v1080 = vpop.permute.xlu0 %1079
      %1081 = vrot.lane.b32.xlu0 %v1036, 56
      %v1082 = vpop.permute.xlu0 %1081
      %1083 = vrot.lane.b32.xlu0 %v1038, 56
      %v1084 = vpop.permute.xlu0 %1083
      %1085 = vrot.lane.b32.xlu0 %v1040, 56
      %v1086 = vpop.permute.xlu0 %1085
      %1087 = vrot.lane.b32.xlu0 %v1042, 56
      %v1088 = vpop.permute.xlu0 %1087
      %1089 = vrot.lane.b32.xlu0 %v1044, 56
      %v1090 = vpop.permute.xlu0 %1089
      %1091 = vrot.lane.b32.xlu0 %v1046, 56
      %v1092 = vpop.permute.xlu0 %1091
      %vm1116 = vcmask 1041408
      %v1117 = vrot.slane %v341, 6
      %v1118 = vrot.slane %v342, 6
      %v1119 = vsel %vm1116, %v1117, %v1118
      %v1120 = vrot.slane %v343, 6
      %v1121 = vsel %vm1116, %v1118, %v1120
      %v1122 = vrot.slane %v344, 6
      %v1123 = vsel %vm1116, %v1120, %v1122
      %v1124 = vrot.slane %v345, 6
      %v1125 = vsel %vm1116, %v1122, %v1124
      %v1126 = vrot.slane %v346, 6
      %v1127 = vsel %vm1116, %v1124, %v1126
      %v1128 = vrot.slane %v347, 6
      %v1129 = vsel %vm1116, %v1126, %v1128
      %v1130 = vrot.slane %v348, 6
      %v1131 = vsel %vm1116, %v1128, %v1130
      %v1132 = vrot.slane %v349, 6
      %v1133 = vsel %vm1116, %v1130, %v1132
      %v1134 = vrot.slane %v350, 6
      %v1135 = vsel %vm1116, %v1132, %v1134
      %v1136 = vrot.slane %v351, 6
      %v1137 = vsel %vm1116, %v1134, %v1136
      %v1138 = vrot.slane %v352, 6
      %v1139 = vsel %vm1116, %v1136, %v1138
      %v1140 = vrot.slane %v353, 6
      %v1141 = vsel %vm1116, %v1138, %v1140
      %v1142 = vrot.slane %v354, 6
      %v1143 = vsel %vm1116, %v1140, %v1142
      %v1144 = vrot.slane %v355, 6
      %v1145 = vsel %vm1116, %v1142, %v1144
      %v1146 = vrot.slane %v356, 6
      %v1147 = vsel %vm1116, %v1144, %v1146
      %v1148 = vrot.slane %v357, 6
      %v1149 = vsel %vm1116, %v1146, %v1148
      %v1150 = vrot.slane %v358, 6
      %v1151 = vsel %vm1116, %v1148, %v1150
      %v1152 = vrot.slane %v359, 6
      %v1153 = vsel %vm1116, %v1150, %v1152
      %v1154 = vrot.slane %v360, 6
      %v1155 = vsel %vm1116, %v1152, %v1154
      %v1156 = vrot.slane %v361, 6
      %v1157 = vsel %vm1116, %v1154, %v1156
      %v1158 = vrot.slane %v362, 6
      %v1159 = vsel %vm1116, %v1156, %v1158
      %v1160 = vrot.slane %v363, 6
      %v1161 = vsel %vm1116, %v1158, %v1160
      %v1162 = vrot.slane %v364, 6
      %v1163 = vsel %vm1116, %v1160, %v1162
      %1164 = vrot.lane.b32.xlu0 %v1119, 64
      %v1165 = vpop.permute.xlu0 %1164
      %1166 = vrot.lane.b32.xlu0 %v1121, 64
      %v1167 = vpop.permute.xlu0 %1166
      %1168 = vrot.lane.b32.xlu0 %v1123, 64
      %v1169 = vpop.permute.xlu0 %1168
      %1170 = vrot.lane.b32.xlu0 %v1125, 64
      %v1171 = vpop.permute.xlu0 %1170
      %1172 = vrot.lane.b32.xlu0 %v1127, 64
      %v1173 = vpop.permute.xlu0 %1172
      %1174 = vrot.lane.b32.xlu0 %v1129, 64
      %v1175 = vpop.permute.xlu0 %1174
      %1176 = vrot.lane.b32.xlu0 %v1131, 64
      %v1177 = vpop.permute.xlu0 %1176
      %1178 = vrot.lane.b32.xlu0 %v1133, 64
      %v1179 = vpop.permute.xlu0 %1178
      %1180 = vrot.lane.b32.xlu0 %v1135, 64
      %v1181 = vpop.permute.xlu0 %1180
      %1182 = vrot.lane.b32.xlu0 %v1137, 64
      %v1183 = vpop.permute.xlu0 %1182
      %1184 = vrot.lane.b32.xlu0 %v1139, 64
      %v1185 = vpop.permute.xlu0 %1184
      %1186 = vrot.lane.b32.xlu0 %v1141, 64
      %v1187 = vpop.permute.xlu0 %1186
      %1188 = vrot.lane.b32.xlu0 %v1143, 64
      %v1189 = vpop.permute.xlu0 %1188
      %1190 = vrot.lane.b32.xlu0 %v1145, 64
      %v1191 = vpop.permute.xlu0 %1190
      %1192 = vrot.lane.b32.xlu0 %v1147, 64
      %v1193 = vpop.permute.xlu0 %1192
      %1194 = vrot.lane.b32.xlu0 %v1149, 64
      %v1195 = vpop.permute.xlu0 %1194
      %1196 = vrot.lane.b32.xlu0 %v1151, 64
      %v1197 = vpop.permute.xlu0 %1196
      %1198 = vrot.lane.b32.xlu0 %v1153, 64
      %v1199 = vpop.permute.xlu0 %1198
      %1200 = vrot.lane.b32.xlu0 %v1155, 64
      %v1201 = vpop.permute.xlu0 %1200
      %1202 = vrot.lane.b32.xlu0 %v1157, 64
      %v1203 = vpop.permute.xlu0 %1202
      %1204 = vrot.lane.b32.xlu0 %v1159, 64
      %v1205 = vpop.permute.xlu0 %1204
      %1206 = vrot.lane.b32.xlu0 %v1161, 64
      %v1207 = vpop.permute.xlu0 %1206
      %1208 = vrot.lane.b32.xlu0 %v1163, 64
      %v1209 = vpop.permute.xlu0 %1208
      %vm1233 = vcmask 64512
      %v1234 = vsel %vm1233, %v337, %v435
      %v1235 = vsel %vm1233, %v338, %v437
      %v1236 = vsel %vm1233, %v339, %v439
      %v1237 = vsel %vm1233, %v340, %v441
      %v1238 = vsel %vm1233, %v341, %v443
      %v1239 = vsel %vm1233, %v342, %v445
      %v1240 = vsel %vm1233, %v343, %v447
      %v1241 = vsel %vm1233, %v344, %v449
      %v1242 = vsel %vm1233, %v345, %v451
      %v1243 = vsel %vm1233, %v346, %v453
      %v1244 = vsel %vm1233, %v347, %v455
      %v1245 = vsel %vm1233, %v348, %v457
      %v1246 = vsel %vm1233, %v349, %v459
      %v1247 = vsel %vm1233, %v350, %v461
      %v1248 = vsel %vm1233, %v351, %v463
      %v1249 = vsel %vm1233, %v352, %v465
      %v1250 = vsel %vm1233, %v353, %v467
      %v1251 = vsel %vm1233, %v354, %v469
      %v1252 = vsel %vm1233, %v355, %v471
      %v1253 = vsel %vm1233, %v356, %v473
      %v1254 = vsel %vm1233, %v357, %v475
      %v1255 = vsel %vm1233, %v358, %v477
      %v1256 = vsel %vm1233, %v359, %v479
      %vm1257 = vcmask 130048
      %v1258 = vsel %vm1257, %v1234, %v550
      %v1259 = vsel %vm1257, %v1235, %v552
      %v1260 = vsel %vm1257, %v1236, %v554
      %v1261 = vsel %vm1257, %v1237, %v556
      %v1262 = vsel %vm1257, %v1238, %v558
      %v1263 = vsel %vm1257, %v1239, %v560
      %v1264 = vsel %vm1257, %v1240, %v562
      %v1265 = vsel %vm1257, %v1241, %v564
      %v1266 = vsel %vm1257, %v1242, %v566
      %v1267 = vsel %vm1257, %v1243, %v568
      %v1268 = vsel %vm1257, %v1244, %v570
      %v1269 = vsel %vm1257, %v1245, %v572
      %v1270 = vsel %vm1257, %v1246, %v574
      %v1271 = vsel %vm1257, %v1247, %v576
      %v1272 = vsel %vm1257, %v1248, %v578
      %v1273 = vsel %vm1257, %v1249, %v580
      %v1274 = vsel %vm1257, %v1250, %v582
      %v1275 = vsel %vm1257, %v1251, %v584
      %v1276 = vsel %vm1257, %v1252, %v586
      %v1277 = vsel %vm1257, %v1253, %v588
      %v1278 = vsel %vm1257, %v1254, %v590
      %v1279 = vsel %vm1257, %v1255, %v592
      %v1280 = vsel %vm1257, %v1256, %v594
      %vm1281 = vcmask 195584
      %v1282 = vsel %vm1281, %v1258, %v625
      %v1283 = vsel %vm1281, %v1259, %v627
      %v1284 = vsel %vm1281, %v1260, %v629
      %v1285 = vsel %vm1281, %v1261, %v631
      %v1286 = vsel %vm1281, %v1262, %v633
      %v1287 = vsel %vm1281, %v1263, %v635
      %v1288 = vsel %vm1281, %v1264, %v637
      %v1289 = vsel %vm1281, %v1265, %v639
      %v1290 = vsel %vm1281, %v1266, %v641
      %v1291 = vsel %vm1281, %v1267, %v643
      %v1292 = vsel %vm1281, %v1268, %v645
      %v1293 = vsel %vm1281, %v1269, %v647
      %v1294 = vsel %vm1281, %v1270, %v649
      %v1295 = vsel %vm1281, %v1271, %v651
      %v1296 = vsel %vm1281, %v1272, %v653
      %v1297 = vsel %vm1281, %v1273, %v655
      %v1298 = vsel %vm1281, %v1274, %v657
      %v1299 = vsel %vm1281, %v1275, %v659
      %v1300 = vsel %vm1281, %v1276, %v661
      %v1301 = vsel %vm1281, %v1277, %v663
      %v1302 = vsel %vm1281, %v1278, %v665
      %v1303 = vsel %vm1281, %v1279, %v667
      %v1304 = vsel %vm1281, %v1280, %v669
      %vm1305 = vcmask 261120
      %v1306 = vsel %vm1305, %v1282, %v740
      %v1307 = vsel %vm1305, %v1283, %v742
      %v1308 = vsel %vm1305, %v1284, %v744
      %v1309 = vsel %vm1305, %v1285, %v746
      %v1310 = vsel %vm1305, %v1286, %v748
      %v1311 = vsel %vm1305, %v1287, %v750
      %v1312 = vsel %vm1305, %v1288, %v752
      %v1313 = vsel %vm1305, %v1289, %v754
      %v1314 = vsel %vm1305, %v1290, %v756
      %v1315 = vsel %vm1305, %v1291, %v758
      %v1316 = vsel %vm1305, %v1292, %v760
      %v1317 = vsel %vm1305, %v1293, %v762
      %v1318 = vsel %vm1305, %v1294, %v764
      %v1319 = vsel %vm1305, %v1295, %v766
      %v1320 = vsel %vm1305, %v1296, %v768
      %v1321 = vsel %vm1305, %v1297, %v770
      %v1322 = vsel %vm1305, %v1298, %v772
      %v1323 = vsel %vm1305, %v1299, %v774
      %v1324 = vsel %vm1305, %v1300, %v776
      %v1325 = vsel %vm1305, %v1301, %v778
      %v1326 = vsel %vm1305, %v1302, %v780
      %v1327 = vsel %vm1305, %v1303, %v782
      %v1328 = vsel %vm1305, %v1304, %v784
      %vm1329 = vcmask 326656
      %v1330 = vsel %vm1329, %v1306, %v855
      %v1331 = vsel %vm1329, %v1307, %v857
      %v1332 = vsel %vm1329, %v1308, %v859
      %v1333 = vsel %vm1329, %v1309, %v861
      %v1334 = vsel %vm1329, %v1310, %v863
      %v1335 = vsel %vm1329, %v1311, %v865
      %v1336 = vsel %vm1329, %v1312, %v867
      %v1337 = vsel %vm1329, %v1313, %v869
      %v1338 = vsel %vm1329, %v1314, %v871
      %v1339 = vsel %vm1329, %v1315, %v873
      %v1340 = vsel %vm1329, %v1316, %v875
      %v1341 = vsel %vm1329, %v1317, %v877
      %v1342 = vsel %vm1329, %v1318, %v879
      %v1343 = vsel %vm1329, %v1319, %v881
      %v1344 = vsel %vm1329, %v1320, %v883
      %v1345 = vsel %vm1329, %v1321, %v885
      %v1346 = vsel %vm1329, %v1322, %v887
      %v1347 = vsel %vm1329, %v1323, %v889
      %v1348 = vsel %vm1329, %v1324, %v891
      %v1349 = vsel %vm1329, %v1325, %v893
      %v1350 = vsel %vm1329, %v1326, %v895
      %v1351 = vsel %vm1329, %v1327, %v897
      %v1352 = vsel %vm1329, %v1328, %v899
      %vm1353 = vcmask 392192
      %v1354 = vsel %vm1353, %v1330, %v930
      %v1355 = vsel %vm1353, %v1331, %v932
      %v1356 = vsel %vm1353, %v1332, %v934
      %v1357 = vsel %vm1353, %v1333, %v936
      %v1358 = vsel %vm1353, %v1334, %v938
      %v1359 = vsel %vm1353, %v1335, %v940
      %v1360 = vsel %vm1353, %v1336, %v942
      %v1361 = vsel %vm1353, %v1337, %v944
      %v1362 = vsel %vm1353, %v1338, %v946
      %v1363 = vsel %vm1353, %v1339, %v948
      %v1364 = vsel %vm1353, %v1340, %v950
      %v1365 = vsel %vm1353, %v1341, %v952
      %v1366 = vsel %vm1353, %v1342, %v954
      %v1367 = vsel %vm1353, %v1343, %v956
      %v1368 = vsel %vm1353, %v1344, %v958
      %v1369 = vsel %vm1353, %v1345, %v960
      %v1370 = vsel %vm1353, %v1346, %v962
      %v1371 = vsel %vm1353, %v1347, %v964
      %v1372 = vsel %vm1353, %v1348, %v966
      %v1373 = vsel %vm1353, %v1349, %v968
      %v1374 = vsel %vm1353, %v1350, %v970
      %v1375 = vsel %vm1353, %v1351, %v972
      %v1376 = vsel %vm1353, %v1352, %v974
      %vm1377 = vcmask 457728
      %v1378 = vsel %vm1377, %v1354, %v1048
      %v1379 = vsel %vm1377, %v1355, %v1050
      %v1380 = vsel %vm1377, %v1356, %v1052
      %v1381 = vsel %vm1377, %v1357, %v1054
      %v1382 = vsel %vm1377, %v1358, %v1056
      %v1383 = vsel %vm1377, %v1359, %v1058
      %v1384 = vsel %vm1377, %v1360, %v1060
      %v1385 = vsel %vm1377, %v1361, %v1062
      %v1386 = vsel %vm1377, %v1362, %v1064
      %v1387 = vsel %vm1377, %v1363, %v1066
      %v1388 = vsel %vm1377, %v1364, %v1068
      %v1389 = vsel %vm1377, %v1365, %v1070
      %v1390 = vsel %vm1377, %v1366, %v1072
      %v1391 = vsel %vm1377, %v1367, %v1074
      %v1392 = vsel %vm1377, %v1368, %v1076
      %v1393 = vsel %vm1377, %v1369, %v1078
      %v1394 = vsel %vm1377, %v1370, %v1080
      %v1395 = vsel %vm1377, %v1371, %v1082
      %v1396 = vsel %vm1377, %v1372, %v1084
      %v1397 = vsel %vm1377, %v1373, %v1086
      %v1398 = vsel %vm1377, %v1374, %v1088
      %v1399 = vsel %vm1377, %v1375, %v1090
      %v1400 = vsel %vm1377, %v1376, %v1092
      %vm1401 = vcmask 523264
      %v1402 = vsel %vm1401, %v1378, %v1165
      %v1403 = vsel %vm1401, %v1379, %v1167
      %v1404 = vsel %vm1401, %v1380, %v1169
      %v1405 = vsel %vm1401, %v1381, %v1171
      %v1406 = vsel %vm1401, %v1382, %v1173
      %v1407 = vsel %vm1401, %v1383, %v1175
      %v1408 = vsel %vm1401, %v1384, %v1177
      %v1409 = vsel %vm1401, %v1385, %v1179
      %v1410 = vsel %vm1401, %v1386, %v1181
      %v1411 = vsel %vm1401, %v1387, %v1183
      %v1412 = vsel %vm1401, %v1388, %v1185
      %v1413 = vsel %vm1401, %v1389, %v1187
      %v1414 = vsel %vm1401, %v1390, %v1189
      %v1415 = vsel %vm1401, %v1391, %v1191
      %v1416 = vsel %vm1401, %v1392, %v1193
      %v1417 = vsel %vm1401, %v1393, %v1195
      %v1418 = vsel %vm1401, %v1394, %v1197
      %v1419 = vsel %vm1401, %v1395, %v1199
      %v1420 = vsel %vm1401, %v1396, %v1201
      %v1421 = vsel %vm1401, %v1397, %v1203
      %v1422 = vsel %vm1401, %v1398, %v1205
      %v1423 = vsel %vm1401, %v1399, %v1207
      %v1424 = vsel %vm1401, %v1400, %v1209
      %v1425 = vpack.c.bf16 %v1403, %v1402
      %v1426 = vpack.c.bf16 %v1405, %v1404
      %v1427 = vpack.c.bf16 %v1407, %v1406
      %v1428 = vpack.c.bf16 %v1409, %v1408
      %v1429 = vpack.c.bf16 %v1411, %v1410
      %v1430 = vpack.c.bf16 %v1413, %v1412
      %v1431 = vpack.c.bf16 %v1415, %v1414
      %v1432 = vpack.c.bf16 %v1417, %v1416
      %v1433 = vpack.c.bf16 %v1419, %v1418
      %v1434 = vpack.c.bf16 %v1421, %v1420
      %v1435 = vpack.c.bf16 %v1423, %v1422
      %v1436 = vpack.c.bf16 %v1424, %v1424
      %v1437 = vld [vmem:[%s2] sm:$0xf]
      %v1438 = vld [vmem:[%s2 + $0x4] sm:$0xf]
      %v1439 = vld [vmem:[%s2 + $0x8] sm:$0xf]
      %v1440 = vld [vmem:[%s2 + $0xc] sm:$0xf]
      %v1441 = vld [vmem:[%s2 + $0x10] sm:$0xf]
      %v1442 = vld [vmem:[%s2 + $0x14] sm:$0xf]
      %v1443 = vld [vmem:[%s2 + $0x18] sm:$0xf]
      %v1444 = vld [vmem:[%s2 + $0x1c] sm:$0xf]
      %v1445 = vld [vmem:[%s2 + $0x20] sm:$0xf]
      %v1446 = vld [vmem:[%s3] sm:$0x1]
      %v1448 = vlaneseq
      %v1449 = vshrl.u32 %v1448, 7
      %v1450 = vsub.s32 0, %v1449
      %v1451 = vrot.slane %v1446, %v1450
      %v1462 = vunpack.c.l.b16 %v1437
      %v1463 = vunpack.c.l.b16 %v1438
      %v1464 = vunpack.c.l.b16 %v1439
      %v1465 = vunpack.c.l.b16 %v1440
      %v1466 = vunpack.c.l.b16 %v1441
      %v1467 = vunpack.c.l.b16 %v1442
      %v1468 = vunpack.c.l.b16 %v1443
      %v1469 = vunpack.c.l.b16 %v1444
      %v1470 = vunpack.c.l.b16 %v1445
      %v1471 = vpack.c.b16 %v1463, %v1462
      %v1472 = vpack.c.b16 %v1465, %v1464
      %v1473 = vpack.c.b16 %v1467, %v1466
      %v1474 = vpack.c.b16 %v1469, %v1468
      %v1475 = vpack.c.b16 %v1470, %v1470
      %vm1480 = vcmask 588800
      %v1482 = vsel %vm1480, %v1425, 0
      %v1485 = vsel %vm1480, %v1426, 0
      %v1488 = vsel %vm1480, %v1427, 0
      %v1491 = vsel %vm1480, %v1428, 0
      %v1494 = vsel %vm1480, %v1429, 0
      %v1497 = vsel %vm1480, %v1430, 0
      %v1500 = vsel %vm1480, %v1431, 0
      %v1503 = vsel %vm1480, %v1432, 0
      %v1506 = vsel %vm1480, %v1433, 0
      %v1509 = vsel %vm1480, %v1434, 0
      %v1512 = vsel %vm1480, %v1435, 0
      %v1515 = vsel %vm1480, %v1436, 0
      %v1518 = vsel %vm808, %v1475, 0
      %1520 = vmatprep.subr.bf16.mxu0 0
      %1521 = vmatpush1.bf16.msra.mxu0 0
      %1522 = vmatprep.subr.bf16.mxu0 0
      %1523 = vmatpush1.bf16.msra.mxu0 0
      %1524 = vmatprep.subr.bf16.mxu0 0
      %1525 = vmatpush1.bf16.msra.mxu0 0
      %1526 = vmatprep.subr.bf16.mxu0 0
      %1527 = vmatpush1.bf16.msra.mxu0 %v1518
      %1528 = vmatprep.subr.bf16.mxu0 0
      %1529 = vmatpush1.bf16.msra.mxu0 %v1474
      %1530 = vmatprep.subr.bf16.mxu0 0
      %1531 = vmatpush1.bf16.msra.mxu0 %v1473
      %1532 = vmatprep.subr.bf16.mxu0 0
      %1533 = vmatpush1.bf16.msra.mxu0 %v1472
      %1534 = vmatprep.subr.bf16.mxu0 0
      %1535 = vmatpush1.bf16.msra.mxu0 %v1471
      %1536 = vmatprep.subr.bf16.mxu0 0
      %1537 = vmatpush2.bf16.msra.mxu0 0
      %1538 = vmatprep.subr.bf16.mxu0 0
      %1539 = vmatpush2.bf16.msra.mxu0 0
      %1540 = vmatprep.subr.bf16.mxu0 0
      %1541 = vmatpush2.bf16.msra.mxu0 0
      %1542 = vmatprep.subr.bf16.mxu0 0
      %1543 = vmatpush2.bf16.msra.mxu0 0
      %1544 = vmatprep.subr.bf16.mxu0 0
      %1545 = vmatpush2.bf16.msra.mxu0 0
      %1546 = vmatprep.subr.bf16.mxu0 0
      %1547 = vmatpush2.bf16.msra.mxu0 0
      %1548 = vmatprep.subr.bf16.mxu0 0
      %1549 = vmatpush2.bf16.msra.mxu0 0
      %1550 = vmatprep.subr.bf16.mxu0 0
      %1551 = vmatpush2.bf16.msra.mxu0 0
      %1552 = vmatprep.mubr.bf16.mxu0 0
      %1553 = vmatmul.mubr.bf16.gmra.mxu0 %v1482
      %v1554 = vpop.f32.mrf.mxu0
      %v1555 = vadd.f32 %v1451, %v1554
      %v1556 = vpop.f32.mrf.mxu0
      %v1557 = vpop.f32.mrf.mxu0
      %v1558 = vadd.f32 %v1451, %v1557
      %v1559 = vpop.f32.mrf.mxu0
      %1560 = vmatprep.mubr.bf16.mxu0 0
      %1561 = vmatmul.mubr.bf16.gmra.mxu0 %v1485
      %v1562 = vpop.f32.mrf.mxu0
      %v1563 = vadd.f32 %v1451, %v1562
      %v1564 = vpop.f32.mrf.mxu0
      %v1565 = vpop.f32.mrf.mxu0
      %v1566 = vadd.f32 %v1451, %v1565
      %v1567 = vpop.f32.mrf.mxu0
      %1568 = vmatprep.mubr.bf16.mxu0 0
      %1569 = vmatmul.mubr.bf16.gmra.mxu0 %v1488
      %v1570 = vpop.f32.mrf.mxu0
      %v1571 = vadd.f32 %v1451, %v1570
      %v1572 = vpop.f32.mrf.mxu0
      %v1573 = vpop.f32.mrf.mxu0
      %v1574 = vadd.f32 %v1451, %v1573
      %v1575 = vpop.f32.mrf.mxu0
      %1576 = vmatprep.mubr.bf16.mxu0 0
      %1577 = vmatmul.mubr.bf16.gmra.mxu0 %v1491
      %v1578 = vpop.f32.mrf.mxu0
      %v1579 = vadd.f32 %v1451, %v1578
      %v1580 = vpop.f32.mrf.mxu0
      %v1581 = vpop.f32.mrf.mxu0
      %v1582 = vadd.f32 %v1451, %v1581
      %v1583 = vpop.f32.mrf.mxu0
      %1584 = vmatprep.mubr.bf16.mxu0 0
      %1585 = vmatmul.mubr.bf16.gmra.mxu0 %v1494
      %v1586 = vpop.f32.mrf.mxu0
      %v1587 = vadd.f32 %v1451, %v1586
      %v1588 = vpop.f32.mrf.mxu0
      %v1589 = vpop.f32.mrf.mxu0
      %v1590 = vadd.f32 %v1451, %v1589
      %v1591 = vpop.f32.mrf.mxu0
      %1592 = vmatprep.mubr.bf16.mxu0 0
      %1593 = vmatmul.mubr.bf16.gmra.mxu0 %v1497
      %v1594 = vpop.f32.mrf.mxu0
      %v1595 = vadd.f32 %v1451, %v1594
      %v1596 = vpop.f32.mrf.mxu0
      %v1597 = vpop.f32.mrf.mxu0
      %v1598 = vadd.f32 %v1451, %v1597
      %v1599 = vpop.f32.mrf.mxu0
      %1600 = vmatprep.mubr.bf16.mxu0 0
      %1601 = vmatmul.mubr.bf16.gmra.mxu0 %v1500
      %v1602 = vpop.f32.mrf.mxu0
      %v1603 = vadd.f32 %v1451, %v1602
      %v1604 = vpop.f32.mrf.mxu0
      %v1605 = vpop.f32.mrf.mxu0
      %v1606 = vadd.f32 %v1451, %v1605
      %v1607 = vpop.f32.mrf.mxu0
      %1608 = vmatprep.mubr.bf16.mxu0 0
      %1609 = vmatmul.mubr.bf16.gmra.mxu0 %v1503
      %v1610 = vpop.f32.mrf.mxu0
      %v1611 = vadd.f32 %v1451, %v1610
      %v1612 = vpop.f32.mrf.mxu0
      %v1613 = vpop.f32.mrf.mxu0
      %v1614 = vadd.f32 %v1451, %v1613
      %v1615 = vpop.f32.mrf.mxu0
      %1616 = vmatprep.mubr.bf16.mxu0 0
      %1617 = vmatmul.mubr.bf16.gmra.mxu0 %v1506
      %v1618 = vpop.f32.mrf.mxu0
      %v1619 = vadd.f32 %v1451, %v1618
      %v1620 = vpop.f32.mrf.mxu0
      %v1621 = vpop.f32.mrf.mxu0
      %v1622 = vadd.f32 %v1451, %v1621
      %v1623 = vpop.f32.mrf.mxu0
      %1624 = vmatprep.mubr.bf16.mxu0 0
      %1625 = vmatmul.mubr.bf16.gmra.mxu0 %v1509
      %v1626 = vpop.f32.mrf.mxu0
      %v1627 = vadd.f32 %v1451, %v1626
      %v1628 = vpop.f32.mrf.mxu0
      %v1629 = vpop.f32.mrf.mxu0
      %v1630 = vadd.f32 %v1451, %v1629
      %v1631 = vpop.f32.mrf.mxu0
      %1632 = vmatprep.mubr.bf16.mxu0 0
      %1633 = vmatmul.mubr.bf16.gmra.mxu0 %v1512
      %v1634 = vpop.f32.mrf.mxu0
      %v1635 = vadd.f32 %v1451, %v1634
      %v1636 = vpop.f32.mrf.mxu0
      %v1637 = vpop.f32.mrf.mxu0
      %v1638 = vadd.f32 %v1451, %v1637
      %v1639 = vpop.f32.mrf.mxu0
      %1640 = vmatprep.mubr.bf16.mxu0 0
      %1641 = vmatmul.mubr.bf16.gmra.mxu0 %v1515
      %v1642 = vpop.f32.mrf.mxu0
      %v1643 = vadd.f32 %v1451, %v1642
      %v1644 = vpop.f32.mrf.mxu0
      %v1645 = vpop.f32.mrf.mxu0
      %v1646 = vpop.f32.mrf.mxu0
      %1647 = vdwg.mxu0
      %v1648 = vmax.f32 %v1555, 0.0
      %v1649 = vmax.f32 %v1558, 0.0
      %v1650 = vmax.f32 %v1563, 0.0
      %v1651 = vmax.f32 %v1566, 0.0
      %v1652 = vmax.f32 %v1571, 0.0
      %v1653 = vmax.f32 %v1574, 0.0
      %v1654 = vmax.f32 %v1579, 0.0
      %v1655 = vmax.f32 %v1582, 0.0
      %v1656 = vmax.f32 %v1587, 0.0
      %v1657 = vmax.f32 %v1590, 0.0
      %v1658 = vmax.f32 %v1595, 0.0
      %v1659 = vmax.f32 %v1598, 0.0
      %v1660 = vmax.f32 %v1603, 0.0
      %v1661 = vmax.f32 %v1606, 0.0
      %v1662 = vmax.f32 %v1611, 0.0
      %v1663 = vmax.f32 %v1614, 0.0
      %v1664 = vmax.f32 %v1619, 0.0
      %v1665 = vmax.f32 %v1622, 0.0
      %v1666 = vmax.f32 %v1627, 0.0
      %v1667 = vmax.f32 %v1630, 0.0
      %v1668 = vmax.f32 %v1635, 0.0
      %v1669 = vmax.f32 %v1638, 0.0
      %v1670 = vmax.f32 %v1643, 0.0
      %v1671 = vld [vmem:[%s298] sm:$0xff]
      %v1672 = vld [vmem:[%s298 + $0x8] sm:$0xff]
      %v1673 = vld [vmem:[%s298 + $0x10] sm:$0xff]
      %v1674 = vld [vmem:[%s298 + $0x18] sm:$0xff]
      %v1675 = vld [vmem:[%s298 + $0x20] sm:$0xff]
      %v1676 = vld [vmem:[%s298 + $0x28] sm:$0xff]
      %v1677 = vld [vmem:[%s298 + $0x30] sm:$0xff]
      %v1678 = vld [vmem:[%s298 + $0x38] sm:$0xff]
      %v1679 = vld [vmem:[%s298 + $0x40] sm:$0xff]
      %v1680 = vld [vmem:[%s298 + $0x48] sm:$0xff]
      %v1681 = vld [vmem:[%s298 + $0x50] sm:$0xff]
      %v1682 = vld [vmem:[%s298 + $0x58] sm:$0xff]
      %v1683 = vld [vmem:[%s298 + $0x60] sm:$0xff]
      %v1684 = vld [vmem:[%s298 + $0x68] sm:$0xff]
      %v1685 = vld [vmem:[%s298 + $0x70] sm:$0xff]
      %v1686 = vld [vmem:[%s298 + $0x78] sm:$0xff]
      %v1687 = vld [vmem:[%s298 + $0x80] sm:$0xff]
      %v1688 = vld [vmem:[%s298 + $0x88] sm:$0xff]
      %v1689 = vld [vmem:[%s298 + $0x90] sm:$0xff]
      %v1690 = vld [vmem:[%s298 + $0x98] sm:$0xff]
      %v1691 = vld [vmem:[%s298 + $0xa0] sm:$0xff]
      %v1692 = vld [vmem:[%s298 + $0xa8] sm:$0xff]
      %v1693 = vld [vmem:[%s298 + $0xb0] sm:$0xf]
      %1695 = vset.pattern.permute.xlu0 0
      %1696 = vperm.xlu0 %1695, %v1671
      %v1697 = vpop.permute.xlu0 %1696
      %1700 = vset.pattern.permute.xlu0 0
      %1701 = vperm.xlu0 %1700, %v1672
      %v1702 = vpop.permute.xlu0 %1701
      %1705 = vset.pattern.permute.xlu0 0
      %1706 = vperm.xlu0 %1705, %v1673
      %v1707 = vpop.permute.xlu0 %1706
      %1710 = vset.pattern.permute.xlu0 0
      %1711 = vperm.xlu0 %1710, %v1674
      %v1712 = vpop.permute.xlu0 %1711
      %1715 = vset.pattern.permute.xlu0 0
      %1716 = vperm.xlu0 %1715, %v1675
      %v1717 = vpop.permute.xlu0 %1716
      %1720 = vset.pattern.permute.xlu0 0
      %1721 = vperm.xlu0 %1720, %v1676
      %v1722 = vpop.permute.xlu0 %1721
      %1725 = vset.pattern.permute.xlu0 0
      %1726 = vperm.xlu0 %1725, %v1677
      %v1727 = vpop.permute.xlu0 %1726
      %1730 = vset.pattern.permute.xlu0 0
      %1731 = vperm.xlu0 %1730, %v1678
      %v1732 = vpop.permute.xlu0 %1731
      %1735 = vset.pattern.permute.xlu0 0
      %1736 = vperm.xlu0 %1735, %v1679
      %v1737 = vpop.permute.xlu0 %1736
      %1740 = vset.pattern.permute.xlu0 0
      %1741 = vperm.xlu0 %1740, %v1680
      %v1742 = vpop.permute.xlu0 %1741
      %1745 = vset.pattern.permute.xlu0 0
      %1746 = vperm.xlu0 %1745, %v1681
      %v1747 = vpop.permute.xlu0 %1746
      %1750 = vset.pattern.permute.xlu0 0
      %1751 = vperm.xlu0 %1750, %v1682
      %v1752 = vpop.permute.xlu0 %1751
      %1755 = vset.pattern.permute.xlu0 0
      %1756 = vperm.xlu0 %1755, %v1683
      %v1757 = vpop.permute.xlu0 %1756
      %1760 = vset.pattern.permute.xlu0 0
      %1761 = vperm.xlu0 %1760, %v1684
      %v1762 = vpop.permute.xlu0 %1761
      %1765 = vset.pattern.permute.xlu0 0
      %1766 = vperm.xlu0 %1765, %v1685
      %v1767 = vpop.permute.xlu0 %1766
      %1770 = vset.pattern.permute.xlu0 0
      %1771 = vperm.xlu0 %1770, %v1686
      %v1772 = vpop.permute.xlu0 %1771
      %1775 = vset.pattern.permute.xlu0 0
      %1776 = vperm.xlu0 %1775, %v1687
      %v1777 = vpop.permute.xlu0 %1776
      %1780 = vset.pattern.permute.xlu0 0
      %1781 = vperm.xlu0 %1780, %v1688
      %v1782 = vpop.permute.xlu0 %1781
      %1785 = vset.pattern.permute.xlu0 0
      %1786 = vperm.xlu0 %1785, %v1689
      %v1787 = vpop.permute.xlu0 %1786
      %1790 = vset.pattern.permute.xlu0 0
      %1791 = vperm.xlu0 %1790, %v1690
      %v1792 = vpop.permute.xlu0 %1791
      %1795 = vset.pattern.permute.xlu0 0
      %1796 = vperm.xlu0 %1795, %v1691
      %v1797 = vpop.permute.xlu0 %1796
      %1800 = vset.pattern.permute.xlu0 0
      %1801 = vperm.xlu0 %1800, %v1692
      %v1802 = vpop.permute.xlu0 %1801
      %1805 = vset.pattern.permute.xlu0 0
      %1806 = vperm.xlu0 %1805, %v1693
      %v1807 = vpop.permute.xlu0 %1806
      %v1809 = vmul.f32 %v1648, %v1697
      %v1810 = vmul.f32 %v1649, %v1702
      %v1811 = vmul.f32 %v1650, %v1707
      %v1812 = vmul.f32 %v1651, %v1712
      %v1813 = vmul.f32 %v1652, %v1717
      %v1814 = vmul.f32 %v1653, %v1722
      %v1815 = vmul.f32 %v1654, %v1727
      %v1816 = vmul.f32 %v1655, %v1732
      %v1817 = vmul.f32 %v1656, %v1737
      %v1818 = vmul.f32 %v1657, %v1742
      %v1819 = vmul.f32 %v1658, %v1747
      %v1820 = vmul.f32 %v1659, %v1752
      %v1821 = vmul.f32 %v1660, %v1757
      %v1822 = vmul.f32 %v1661, %v1762
      %v1823 = vmul.f32 %v1662, %v1767
      %v1824 = vmul.f32 %v1663, %v1772
      %v1825 = vmul.f32 %v1664, %v1777
      %v1826 = vmul.f32 %v1665, %v1782
      %v1827 = vmul.f32 %v1666, %v1787
      %v1828 = vmul.f32 %v1667, %v1792
      %v1829 = vmul.f32 %v1668, %v1797
      %v1830 = vmul.f32 %v1669, %v1802
      %v1831 = vmul.f32 %v1670, %v1807
      %vm1855 = vcmask 1040384
      %v1856 = vrot.slane %v1809, 7
      %v1857 = vrot.slane %v1810, 7
      %v1858 = vsel %vm1855, %v1856, %v1857
      %v1859 = vrot.slane %v1811, 7
      %v1860 = vsel %vm1855, %v1857, %v1859
      %v1861 = vrot.slane %v1812, 7
      %v1862 = vsel %vm1855, %v1859, %v1861
      %v1863 = vrot.slane %v1813, 7
      %v1864 = vsel %vm1855, %v1861, %v1863
      %v1865 = vrot.slane %v1814, 7
      %v1866 = vsel %vm1855, %v1863, %v1865
      %v1867 = vrot.slane %v1815, 7
      %v1868 = vsel %vm1855, %v1865, %v1867
      %v1869 = vrot.slane %v1816, 7
      %v1870 = vsel %vm1855, %v1867, %v1869
      %v1871 = vrot.slane %v1817, 7
      %v1872 = vsel %vm1855, %v1869, %v1871
      %v1873 = vrot.slane %v1818, 7
      %v1874 = vsel %vm1855, %v1871, %v1873
      %v1875 = vrot.slane %v1819, 7
      %v1876 = vsel %vm1855, %v1873, %v1875
      %v1877 = vrot.slane %v1820, 7
      %v1878 = vsel %vm1855, %v1875, %v1877
      %v1879 = vrot.slane %v1821, 7
      %v1880 = vsel %vm1855, %v1877, %v1879
      %v1881 = vrot.slane %v1822, 7
      %v1882 = vsel %vm1855, %v1879, %v1881
      %v1883 = vrot.slane %v1823, 7
      %v1884 = vsel %vm1855, %v1881, %v1883
      %v1885 = vrot.slane %v1824, 7
      %v1886 = vsel %vm1855, %v1883, %v1885
      %v1887 = vrot.slane %v1825, 7
      %v1888 = vsel %vm1855, %v1885, %v1887
      %v1889 = vrot.slane %v1826, 7
      %v1890 = vsel %vm1855, %v1887, %v1889
      %v1891 = vrot.slane %v1827, 7
      %v1892 = vsel %vm1855, %v1889, %v1891
      %v1893 = vrot.slane %v1828, 7
      %v1894 = vsel %vm1855, %v1891, %v1893
      %v1895 = vrot.slane %v1829, 7
      %v1896 = vsel %vm1855, %v1893, %v1895
      %v1897 = vrot.slane %v1830, 7
      %v1898 = vsel %vm1855, %v1895, %v1897
      %v1899 = vrot.slane %v1831, 7
      %v1900 = vsel %vm1855, %v1897, %v1899
      %v1920 = vsel %vm1855, 0.0, %v1856
      %v1921 = vsel %vm693, %v1900, 0.0
      %v1923 = vrot.slane %v1920, 1
      %v1924 = vrot.slane %v1858, 1
      %v1925 = vsel %vm388, %v1923, %v1924
      %v1926 = vrot.slane %v1860, 1
      %v1927 = vsel %vm388, %v1924, %v1926
      %v1928 = vrot.slane %v1862, 1
      %v1929 = vsel %vm388, %v1926, %v1928
      %v1930 = vrot.slane %v1864, 1
      %v1931 = vsel %vm388, %v1928, %v1930
      %v1932 = vrot.slane %v1866, 1
      %v1933 = vsel %vm388, %v1930, %v1932
      %v1934 = vrot.slane %v1868, 1
      %v1935 = vsel %vm388, %v1932, %v1934
      %v1936 = vrot.slane %v1870, 1
      %v1937 = vsel %vm388, %v1934, %v1936
      %v1938 = vrot.slane %v1872, 1
      %v1939 = vsel %vm388, %v1936, %v1938
      %v1940 = vrot.slane %v1874, 1
      %v1941 = vsel %vm388, %v1938, %v1940
      %v1942 = vrot.slane %v1876, 1
      %v1943 = vsel %vm388, %v1940, %v1942
      %v1944 = vrot.slane %v1878, 1
      %v1945 = vsel %vm388, %v1942, %v1944
      %v1946 = vrot.slane %v1880, 1
      %v1947 = vsel %vm388, %v1944, %v1946
      %v1948 = vrot.slane %v1882, 1
      %v1949 = vsel %vm388, %v1946, %v1948
      %v1950 = vrot.slane %v1884, 1
      %v1951 = vsel %vm388, %v1948, %v1950
      %v1952 = vrot.slane %v1886, 1
      %v1953 = vsel %vm388, %v1950, %v1952
      %v1954 = vrot.slane %v1888, 1
      %v1955 = vsel %vm388, %v1952, %v1954
      %v1956 = vrot.slane %v1890, 1
      %v1957 = vsel %vm388, %v1954, %v1956
      %v1958 = vrot.slane %v1892, 1
      %v1959 = vsel %vm388, %v1956, %v1958
      %1960 = vrot.lane.b32.xlu0 %v1925, 8
      %v1961 = vpop.permute.xlu0 %1960
      %1962 = vrot.lane.b32.xlu0 %v1927, 8
      %v1963 = vpop.permute.xlu0 %1962
      %1964 = vrot.lane.b32.xlu0 %v1929, 8
      %v1965 = vpop.permute.xlu0 %1964
      %1966 = vrot.lane.b32.xlu0 %v1931, 8
      %v1967 = vpop.permute.xlu0 %1966
      %1968 = vrot.lane.b32.xlu0 %v1933, 8
      %v1969 = vpop.permute.xlu0 %1968
      %1970 = vrot.lane.b32.xlu0 %v1935, 8
      %v1971 = vpop.permute.xlu0 %1970
      %1972 = vrot.lane.b32.xlu0 %v1937, 8
      %v1973 = vpop.permute.xlu0 %1972
      %1974 = vrot.lane.b32.xlu0 %v1939, 8
      %v1975 = vpop.permute.xlu0 %1974
      %1976 = vrot.lane.b32.xlu0 %v1941, 8
      %v1977 = vpop.permute.xlu0 %1976
      %1978 = vrot.lane.b32.xlu0 %v1943, 8
      %v1979 = vpop.permute.xlu0 %1978
      %1980 = vrot.lane.b32.xlu0 %v1945, 8
      %v1981 = vpop.permute.xlu0 %1980
      %1982 = vrot.lane.b32.xlu0 %v1947, 8
      %v1983 = vpop.permute.xlu0 %1982
      %1984 = vrot.lane.b32.xlu0 %v1949, 8
      %v1985 = vpop.permute.xlu0 %1984
      %1986 = vrot.lane.b32.xlu0 %v1951, 8
      %v1987 = vpop.permute.xlu0 %1986
      %1988 = vrot.lane.b32.xlu0 %v1953, 8
      %v1989 = vpop.permute.xlu0 %1988
      %1990 = vrot.lane.b32.xlu0 %v1955, 8
      %v1991 = vpop.permute.xlu0 %1990
      %1992 = vrot.lane.b32.xlu0 %v1957, 8
      %v1993 = vpop.permute.xlu0 %1992
      %1994 = vrot.lane.b32.xlu0 %v1959, 8
      %v1995 = vpop.permute.xlu0 %1994
      %v2014 = vrot.slane %v1920, 2
      %v2015 = vrot.slane %v1858, 2
      %v2016 = vsel %vm503, %v2014, %v2015
      %v2017 = vrot.slane %v1860, 2
      %v2018 = vsel %vm503, %v2015, %v2017
      %v2019 = vrot.slane %v1862, 2
      %v2020 = vsel %vm503, %v2017, %v2019
      %v2021 = vrot.slane %v1864, 2
      %v2022 = vsel %vm503, %v2019, %v2021
      %v2023 = vrot.slane %v1866, 2
      %v2024 = vsel %vm503, %v2021, %v2023
      %v2025 = vrot.slane %v1868, 2
      %v2026 = vsel %vm503, %v2023, %v2025
      %v2027 = vrot.slane %v1870, 2
      %v2028 = vsel %vm503, %v2025, %v2027
      %v2029 = vrot.slane %v1872, 2
      %v2030 = vsel %vm503, %v2027, %v2029
      %v2031 = vrot.slane %v1874, 2
      %v2032 = vsel %vm503, %v2029, %v2031
      %v2033 = vrot.slane %v1876, 2
      %v2034 = vsel %vm503, %v2031, %v2033
      %v2035 = vrot.slane %v1878, 2
      %v2036 = vsel %vm503, %v2033, %v2035
      %v2037 = vrot.slane %v1880, 2
      %v2038 = vsel %vm503, %v2035, %v2037
      %v2039 = vrot.slane %v1882, 2
      %v2040 = vsel %vm503, %v2037, %v2039
      %v2041 = vrot.slane %v1884, 2
      %v2042 = vsel %vm503, %v2039, %v2041
      %v2043 = vrot.slane %v1886, 2
      %v2044 = vsel %vm503, %v2041, %v2043
      %v2045 = vrot.slane %v1888, 2
      %v2046 = vsel %vm503, %v2043, %v2045
      %v2047 = vrot.slane %v1890, 2
      %v2048 = vsel %vm503, %v2045, %v2047
      %v2049 = vrot.slane %v1892, 2
      %v2050 = vsel %vm503, %v2047, %v2049
      %2051 = vrot.lane.b32.xlu0 %v2016, 16
      %v2052 = vpop.permute.xlu0 %2051
      %2053 = vrot.lane.b32.xlu0 %v2018, 16
      %v2054 = vpop.permute.xlu0 %2053
      %2055 = vrot.lane.b32.xlu0 %v2020, 16
      %v2056 = vpop.permute.xlu0 %2055
      %2057 = vrot.lane.b32.xlu0 %v2022, 16
      %v2058 = vpop.permute.xlu0 %2057
      %2059 = vrot.lane.b32.xlu0 %v2024, 16
      %v2060 = vpop.permute.xlu0 %2059
      %2061 = vrot.lane.b32.xlu0 %v2026, 16
      %v2062 = vpop.permute.xlu0 %2061
      %2063 = vrot.lane.b32.xlu0 %v2028, 16
      %v2064 = vpop.permute.xlu0 %2063
      %2065 = vrot.lane.b32.xlu0 %v2030, 16
      %v2066 = vpop.permute.xlu0 %2065
      %2067 = vrot.lane.b32.xlu0 %v2032, 16
      %v2068 = vpop.permute.xlu0 %2067
      %2069 = vrot.lane.b32.xlu0 %v2034, 16
      %v2070 = vpop.permute.xlu0 %2069
      %2071 = vrot.lane.b32.xlu0 %v2036, 16
      %v2072 = vpop.permute.xlu0 %2071
      %2073 = vrot.lane.b32.xlu0 %v2038, 16
      %v2074 = vpop.permute.xlu0 %2073
      %2075 = vrot.lane.b32.xlu0 %v2040, 16
      %v2076 = vpop.permute.xlu0 %2075
      %2077 = vrot.lane.b32.xlu0 %v2042, 16
      %v2078 = vpop.permute.xlu0 %2077
      %2079 = vrot.lane.b32.xlu0 %v2044, 16
      %v2080 = vpop.permute.xlu0 %2079
      %2081 = vrot.lane.b32.xlu0 %v2046, 16
      %v2082 = vpop.permute.xlu0 %2081
      %2083 = vrot.lane.b32.xlu0 %v2048, 16
      %v2084 = vpop.permute.xlu0 %2083
      %2085 = vrot.lane.b32.xlu0 %v2050, 16
      %v2086 = vpop.permute.xlu0 %2085
      %v2105 = vrot.slane %v1894, 2
      %v2106 = vsel %vm503, %v2049, %v2105
      %v2107 = vrot.slane %v1896, 2
      %v2108 = vsel %vm503, %v2105, %v2107
      %2109 = vrot.lane.b32.xlu0 %v2020, 24
      %v2110 = vpop.permute.xlu0 %2109
      %2111 = vrot.lane.b32.xlu0 %v2022, 24
      %v2112 = vpop.permute.xlu0 %2111
      %2113 = vrot.lane.b32.xlu0 %v2024, 24
      %v2114 = vpop.permute.xlu0 %2113
      %2115 = vrot.lane.b32.xlu0 %v2026, 24
      %v2116 = vpop.permute.xlu0 %2115
      %2117 = vrot.lane.b32.xlu0 %v2028, 24
      %v2118 = vpop.permute.xlu0 %2117
      %2119 = vrot.lane.b32.xlu0 %v2030, 24
      %v2120 = vpop.permute.xlu0 %2119
      %2121 = vrot.lane.b32.xlu0 %v2032, 24
      %v2122 = vpop.permute.xlu0 %2121
      %2123 = vrot.lane.b32.xlu0 %v2034, 24
      %v2124 = vpop.permute.xlu0 %2123
      %2125 = vrot.lane.b32.xlu0 %v2036, 24
      %v2126 = vpop.permute.xlu0 %2125
      %2127 = vrot.lane.b32.xlu0 %v2038, 24
      %v2128 = vpop.permute.xlu0 %2127
      %2129 = vrot.lane.b32.xlu0 %v2040, 24
      %v2130 = vpop.permute.xlu0 %2129
      %2131 = vrot.lane.b32.xlu0 %v2042, 24
      %v2132 = vpop.permute.xlu0 %2131
      %2133 = vrot.lane.b32.xlu0 %v2044, 24
      %v2134 = vpop.permute.xlu0 %2133
      %2135 = vrot.lane.b32.xlu0 %v2046, 24
      %v2136 = vpop.permute.xlu0 %2135
      %2137 = vrot.lane.b32.xlu0 %v2048, 24
      %v2138 = vpop.permute.xlu0 %2137
      %2139 = vrot.lane.b32.xlu0 %v2050, 24
      %v2140 = vpop.permute.xlu0 %2139
      %2141 = vrot.lane.b32.xlu0 %v2106, 24
      %v2142 = vpop.permute.xlu0 %2141
      %2143 = vrot.lane.b32.xlu0 %v2108, 24
      %v2144 = vpop.permute.xlu0 %2143
      %v2163 = vrot.slane %v1860, 3
      %v2164 = vrot.slane %v1862, 3
      %v2165 = vsel %vm693, %v2163, %v2164
      %v2166 = vrot.slane %v1864, 3
      %v2167 = vsel %vm693, %v2164, %v2166
      %v2168 = vrot.slane %v1866, 3
      %v2169 = vsel %vm693, %v2166, %v2168
      %v2170 = vrot.slane %v1868, 3
      %v2171 = vsel %vm693, %v2168, %v2170
      %v2172 = vrot.slane %v1870, 3
      %v2173 = vsel %vm693, %v2170, %v2172
      %v2174 = vrot.slane %v1872, 3
      %v2175 = vsel %vm693, %v2172, %v2174
      %v2176 = vrot.slane %v1874, 3
      %v2177 = vsel %vm693, %v2174, %v2176
      %v2178 = vrot.slane %v1876, 3
      %v2179 = vsel %vm693, %v2176, %v2178
      %v2180 = vrot.slane %v1878, 3
      %v2181 = vsel %vm693, %v2178, %v2180
      %v2182 = vrot.slane %v1880, 3
      %v2183 = vsel %vm693, %v2180, %v2182
      %v2184 = vrot.slane %v1882, 3
      %v2185 = vsel %vm693, %v2182, %v2184
      %v2186 = vrot.slane %v1884, 3
      %v2187 = vsel %vm693, %v2184, %v2186
      %v2188 = vrot.slane %v1886, 3
      %v2189 = vsel %vm693, %v2186, %v2188
      %v2190 = vrot.slane %v1888, 3
      %v2191 = vsel %vm693, %v2188, %v2190
      %v2192 = vrot.slane %v1890, 3
      %v2193 = vsel %vm693, %v2190, %v2192
      %v2194 = vrot.slane %v1892, 3
      %v2195 = vsel %vm693, %v2192, %v2194
      %v2196 = vrot.slane %v1894, 3
      %v2197 = vsel %vm693, %v2194, %v2196
      %v2198 = vrot.slane %v1896, 3
      %v2199 = vsel %vm693, %v2196, %v2198
      %2200 = vrot.lane.b32.xlu0 %v2165, 32
      %v2201 = vpop.permute.xlu0 %2200
      %2202 = vrot.lane.b32.xlu0 %v2167, 32
      %v2203 = vpop.permute.xlu0 %2202
      %2204 = vrot.lane.b32.xlu0 %v2169, 32
      %v2205 = vpop.permute.xlu0 %2204
      %2206 = vrot.lane.b32.xlu0 %v2171, 32
      %v2207 = vpop.permute.xlu0 %2206
      %2208 = vrot.lane.b32.xlu0 %v2173, 32
      %v2209 = vpop.permute.xlu0 %2208
      %2210 = vrot.lane.b32.xlu0 %v2175, 32
      %v2211 = vpop.permute.xlu0 %2210
      %2212 = vrot.lane.b32.xlu0 %v2177, 32
      %v2213 = vpop.permute.xlu0 %2212
      %2214 = vrot.lane.b32.xlu0 %v2179, 32
      %v2215 = vpop.permute.xlu0 %2214
      %2216 = vrot.lane.b32.xlu0 %v2181, 32
      %v2217 = vpop.permute.xlu0 %2216
      %2218 = vrot.lane.b32.xlu0 %v2183, 32
      %v2219 = vpop.permute.xlu0 %2218
      %2220 = vrot.lane.b32.xlu0 %v2185, 32
      %v2221 = vpop.permute.xlu0 %2220
      %2222 = vrot.lane.b32.xlu0 %v2187, 32
      %v2223 = vpop.permute.xlu0 %2222
      %2224 = vrot.lane.b32.xlu0 %v2189, 32
      %v2225 = vpop.permute.xlu0 %2224
      %2226 = vrot.lane.b32.xlu0 %v2191, 32
      %v2227 = vpop.permute.xlu0 %2226
      %2228 = vrot.lane.b32.xlu0 %v2193, 32
      %v2229 = vpop.permute.xlu0 %2228
      %2230 = vrot.lane.b32.xlu0 %v2195, 32
      %v2231 = vpop.permute.xlu0 %2230
      %2232 = vrot.lane.b32.xlu0 %v2197, 32
      %v2233 = vpop.permute.xlu0 %2232
      %2234 = vrot.lane.b32.xlu0 %v2199, 32
      %v2235 = vpop.permute.xlu0 %2234
      %v2254 = vrot.slane %v1860, 4
      %v2255 = vrot.slane %v1862, 4
      %v2256 = vsel %vm808, %v2254, %v2255
      %v2257 = vrot.slane %v1864, 4
      %v2258 = vsel %vm808, %v2255, %v2257
      %v2259 = vrot.slane %v1866, 4
      %v2260 = vsel %vm808, %v2257, %v2259
      %v2261 = vrot.slane %v1868, 4
      %v2262 = vsel %vm808, %v2259, %v2261
      %v2263 = vrot.slane %v1870, 4
      %v2264 = vsel %vm808, %v2261, %v2263
      %v2265 = vrot.slane %v1872, 4
      %v2266 = vsel %vm808, %v2263, %v2265
      %v2267 = vrot.slane %v1874, 4
      %v2268 = vsel %vm808, %v2265, %v2267
      %v2269 = vrot.slane %v1876, 4
      %v2270 = vsel %vm808, %v2267, %v2269
      %v2271 = vrot.slane %v1878, 4
      %v2272 = vsel %vm808, %v2269, %v2271
      %v2273 = vrot.slane %v1880, 4
      %v2274 = vsel %vm808, %v2271, %v2273
      %v2275 = vrot.slane %v1882, 4
      %v2276 = vsel %vm808, %v2273, %v2275
      %v2277 = vrot.slane %v1884, 4
      %v2278 = vsel %vm808, %v2275, %v2277
      %v2279 = vrot.slane %v1886, 4
      %v2280 = vsel %vm808, %v2277, %v2279
      %v2281 = vrot.slane %v1888, 4
      %v2282 = vsel %vm808, %v2279, %v2281
      %v2283 = vrot.slane %v1890, 4
      %v2284 = vsel %vm808, %v2281, %v2283
      %v2285 = vrot.slane %v1892, 4
      %v2286 = vsel %vm808, %v2283, %v2285
      %v2287 = vrot.slane %v1894, 4
      %v2288 = vsel %vm808, %v2285, %v2287
      %v2289 = vrot.slane %v1896, 4
      %v2290 = vsel %vm808, %v2287, %v2289
      %2291 = vrot.lane.b32.xlu0 %v2256, 40
      %v2292 = vpop.permute.xlu0 %2291
      %2293 = vrot.lane.b32.xlu0 %v2258, 40
      %v2294 = vpop.permute.xlu0 %2293
      %2295 = vrot.lane.b32.xlu0 %v2260, 40
      %v2296 = vpop.permute.xlu0 %2295
      %2297 = vrot.lane.b32.xlu0 %v2262, 40
      %v2298 = vpop.permute.xlu0 %2297
      %2299 = vrot.lane.b32.xlu0 %v2264, 40
      %v2300 = vpop.permute.xlu0 %2299
      %2301 = vrot.lane.b32.xlu0 %v2266, 40
      %v2302 = vpop.permute.xlu0 %2301
      %2303 = vrot.lane.b32.xlu0 %v2268, 40
      %v2304 = vpop.permute.xlu0 %2303
      %2305 = vrot.lane.b32.xlu0 %v2270, 40
      %v2306 = vpop.permute.xlu0 %2305
      %2307 = vrot.lane.b32.xlu0 %v2272, 40
      %v2308 = vpop.permute.xlu0 %2307
      %2309 = vrot.lane.b32.xlu0 %v2274, 40
      %v2310 = vpop.permute.xlu0 %2309
      %2311 = vrot.lane.b32.xlu0 %v2276, 40
      %v2312 = vpop.permute.xlu0 %2311
      %2313 = vrot.lane.b32.xlu0 %v2278, 40
      %v2314 = vpop.permute.xlu0 %2313
      %2315 = vrot.lane.b32.xlu0 %v2280, 40
      %v2316 = vpop.permute.xlu0 %2315
      %2317 = vrot.lane.b32.xlu0 %v2282, 40
      %v2318 = vpop.permute.xlu0 %2317
      %2319 = vrot.lane.b32.xlu0 %v2284, 40
      %v2320 = vpop.permute.xlu0 %2319
      %2321 = vrot.lane.b32.xlu0 %v2286, 40
      %v2322 = vpop.permute.xlu0 %2321
      %2323 = vrot.lane.b32.xlu0 %v2288, 40
      %v2324 = vpop.permute.xlu0 %2323
      %2325 = vrot.lane.b32.xlu0 %v2290, 40
      %v2326 = vpop.permute.xlu0 %2325
      %v2346 = vrot.slane %v1898, 4
      %v2347 = vsel %vm808, %v2289, %v2346
      %v2348 = vrot.slane %v1921, 4
      %v2349 = vsel %vm808, %v2346, %v2348
      %2350 = vrot.lane.b32.xlu0 %v2260, 48
      %v2351 = vpop.permute.xlu0 %2350
      %2352 = vrot.lane.b32.xlu0 %v2262, 48
      %v2353 = vpop.permute.xlu0 %2352
      %2354 = vrot.lane.b32.xlu0 %v2264, 48
      %v2355 = vpop.permute.xlu0 %2354
      %2356 = vrot.lane.b32.xlu0 %v2266, 48
      %v2357 = vpop.permute.xlu0 %2356
      %2358 = vrot.lane.b32.xlu0 %v2268, 48
      %v2359 = vpop.permute.xlu0 %2358
      %2360 = vrot.lane.b32.xlu0 %v2270, 48
      %v2361 = vpop.permute.xlu0 %2360
      %2362 = vrot.lane.b32.xlu0 %v2272, 48
      %v2363 = vpop.permute.xlu0 %2362
      %2364 = vrot.lane.b32.xlu0 %v2274, 48
      %v2365 = vpop.permute.xlu0 %2364
      %2366 = vrot.lane.b32.xlu0 %v2276, 48
      %v2367 = vpop.permute.xlu0 %2366
      %2368 = vrot.lane.b32.xlu0 %v2278, 48
      %v2369 = vpop.permute.xlu0 %2368
      %2370 = vrot.lane.b32.xlu0 %v2280, 48
      %v2371 = vpop.permute.xlu0 %2370
      %2372 = vrot.lane.b32.xlu0 %v2282, 48
      %v2373 = vpop.permute.xlu0 %2372
      %2374 = vrot.lane.b32.xlu0 %v2284, 48
      %v2375 = vpop.permute.xlu0 %2374
      %2376 = vrot.lane.b32.xlu0 %v2286, 48
      %v2377 = vpop.permute.xlu0 %2376
      %2378 = vrot.lane.b32.xlu0 %v2288, 48
      %v2379 = vpop.permute.xlu0 %2378
      %2380 = vrot.lane.b32.xlu0 %v2290, 48
      %v2381 = vpop.permute.xlu0 %2380
      %2382 = vrot.lane.b32.xlu0 %v2347, 48
      %v2383 = vpop.permute.xlu0 %2382
      %2384 = vrot.lane.b32.xlu0 %v2349, 48
      %v2385 = vpop.permute.xlu0 %2384
      %v2404 = vrot.slane %v1864, 5
      %v2405 = vrot.slane %v1866, 5
      %v2406 = vsel %vm999, %v2404, %v2405
      %v2407 = vrot.slane %v1868, 5
      %v2408 = vsel %vm999, %v2405, %v2407
      %v2409 = vrot.slane %v1870, 5
      %v2410 = vsel %vm999, %v2407, %v2409
      %v2411 = vrot.slane %v1872, 5
      %v2412 = vsel %vm999, %v2409, %v2411
      %v2413 = vrot.slane %v1874, 5
      %v2414 = vsel %vm999, %v2411, %v2413
      %v2415 = vrot.slane %v1876, 5
      %v2416 = vsel %vm999, %v2413, %v2415
      %v2417 = vrot.slane %v1878, 5
      %v2418 = vsel %vm999, %v2415, %v2417
      %v2419 = vrot.slane %v1880, 5
      %v2420 = vsel %vm999, %v2417, %v2419
      %v2421 = vrot.slane %v1882, 5
      %v2422 = vsel %vm999, %v2419, %v2421
      %v2423 = vrot.slane %v1884, 5
      %v2424 = vsel %vm999, %v2421, %v2423
      %v2425 = vrot.slane %v1886, 5
      %v2426 = vsel %vm999, %v2423, %v2425
      %v2427 = vrot.slane %v1888, 5
      %v2428 = vsel %vm999, %v2425, %v2427
      %v2429 = vrot.slane %v1890, 5
      %v2430 = vsel %vm999, %v2427, %v2429
      %v2431 = vrot.slane %v1892, 5
      %v2432 = vsel %vm999, %v2429, %v2431
      %v2433 = vrot.slane %v1894, 5
      %v2434 = vsel %vm999, %v2431, %v2433
      %v2435 = vrot.slane %v1896, 5
      %v2436 = vsel %vm999, %v2433, %v2435
      %v2437 = vrot.slane %v1898, 5
      %v2438 = vsel %vm999, %v2435, %v2437
      %v2439 = vrot.slane %v1921, 5
      %v2440 = vsel %vm999, %v2437, %v2439
      %2441 = vrot.lane.b32.xlu0 %v2406, 56
      %v2442 = vpop.permute.xlu0 %2441
      %2443 = vrot.lane.b32.xlu0 %v2408, 56
      %v2444 = vpop.permute.xlu0 %2443
      %2445 = vrot.lane.b32.xlu0 %v2410, 56
      %v2446 = vpop.permute.xlu0 %2445
      %2447 = vrot.lane.b32.xlu0 %v2412, 56
      %v2448 = vpop.permute.xlu0 %2447
      %2449 = vrot.lane.b32.xlu0 %v2414, 56
      %v2450 = vpop.permute.xlu0 %2449
      %2451 = vrot.lane.b32.xlu0 %v2416, 56
      %v2452 = vpop.permute.xlu0 %2451
      %2453 = vrot.lane.b32.xlu0 %v2418, 56
      %v2454 = vpop.permute.xlu0 %2453
      %2455 = vrot.lane.b32.xlu0 %v2420, 56
      %v2456 = vpop.permute.xlu0 %2455
      %2457 = vrot.lane.b32.xlu0 %v2422, 56
      %v2458 = vpop.permute.xlu0 %2457
      %2459 = vrot.lane.b32.xlu0 %v2424, 56
      %v2460 = vpop.permute.xlu0 %2459
      %2461 = vrot.lane.b32.xlu0 %v2426, 56
      %v2462 = vpop.permute.xlu0 %2461
      %2463 = vrot.lane.b32.xlu0 %v2428, 56
      %v2464 = vpop.permute.xlu0 %2463
      %2465 = vrot.lane.b32.xlu0 %v2430, 56
      %v2466 = vpop.permute.xlu0 %2465
      %2467 = vrot.lane.b32.xlu0 %v2432, 56
      %v2468 = vpop.permute.xlu0 %2467
      %2469 = vrot.lane.b32.xlu0 %v2434, 56
      %v2470 = vpop.permute.xlu0 %2469
      %2471 = vrot.lane.b32.xlu0 %v2436, 56
      %v2472 = vpop.permute.xlu0 %2471
      %2473 = vrot.lane.b32.xlu0 %v2438, 56
      %v2474 = vpop.permute.xlu0 %2473
      %2475 = vrot.lane.b32.xlu0 %v2440, 56
      %v2476 = vpop.permute.xlu0 %2475
      %v2495 = vrot.slane %v1864, 6
      %v2496 = vrot.slane %v1866, 6
      %v2497 = vsel %vm1116, %v2495, %v2496
      %v2498 = vrot.slane %v1868, 6
      %v2499 = vsel %vm1116, %v2496, %v2498
      %v2500 = vrot.slane %v1870, 6
      %v2501 = vsel %vm1116, %v2498, %v2500
      %v2502 = vrot.slane %v1872, 6
      %v2503 = vsel %vm1116, %v2500, %v2502
      %v2504 = vrot.slane %v1874, 6
      %v2505 = vsel %vm1116, %v2502, %v2504
      %v2506 = vrot.slane %v1876, 6
      %v2507 = vsel %vm1116, %v2504, %v2506
      %v2508 = vrot.slane %v1878, 6
      %v2509 = vsel %vm1116, %v2506, %v2508
      %v2510 = vrot.slane %v1880, 6
      %v2511 = vsel %vm1116, %v2508, %v2510
      %v2512 = vrot.slane %v1882, 6
      %v2513 = vsel %vm1116, %v2510, %v2512
      %v2514 = vrot.slane %v1884, 6
      %v2515 = vsel %vm1116, %v2512, %v2514
      %v2516 = vrot.slane %v1886, 6
      %v2517 = vsel %vm1116, %v2514, %v2516
      %v2518 = vrot.slane %v1888, 6
      %v2519 = vsel %vm1116, %v2516, %v2518
      %v2520 = vrot.slane %v1890, 6
      %v2521 = vsel %vm1116, %v2518, %v2520
      %v2522 = vrot.slane %v1892, 6
      %v2523 = vsel %vm1116, %v2520, %v2522
      %v2524 = vrot.slane %v1894, 6
      %v2525 = vsel %vm1116, %v2522, %v2524
      %v2526 = vrot.slane %v1896, 6
      %v2527 = vsel %vm1116, %v2524, %v2526
      %v2528 = vrot.slane %v1898, 6
      %v2529 = vsel %vm1116, %v2526, %v2528
      %v2530 = vrot.slane %v1921, 6
      %v2531 = vsel %vm1116, %v2528, %v2530
      %2532 = vrot.lane.b32.xlu0 %v2497, 64
      %v2533 = vpop.permute.xlu0 %2532
      %2534 = vrot.lane.b32.xlu0 %v2499, 64
      %v2535 = vpop.permute.xlu0 %2534
      %2536 = vrot.lane.b32.xlu0 %v2501, 64
      %v2537 = vpop.permute.xlu0 %2536
      %2538 = vrot.lane.b32.xlu0 %v2503, 64
      %v2539 = vpop.permute.xlu0 %2538
      %2540 = vrot.lane.b32.xlu0 %v2505, 64
      %v2541 = vpop.permute.xlu0 %2540
      %2542 = vrot.lane.b32.xlu0 %v2507, 64
      %v2543 = vpop.permute.xlu0 %2542
      %2544 = vrot.lane.b32.xlu0 %v2509, 64
      %v2545 = vpop.permute.xlu0 %2544
      %2546 = vrot.lane.b32.xlu0 %v2511, 64
      %v2547 = vpop.permute.xlu0 %2546
      %2548 = vrot.lane.b32.xlu0 %v2513, 64
      %v2549 = vpop.permute.xlu0 %2548
      %2550 = vrot.lane.b32.xlu0 %v2515, 64
      %v2551 = vpop.permute.xlu0 %2550
      %2552 = vrot.lane.b32.xlu0 %v2517, 64
      %v2553 = vpop.permute.xlu0 %2552
      %2554 = vrot.lane.b32.xlu0 %v2519, 64
      %v2555 = vpop.permute.xlu0 %2554
      %2556 = vrot.lane.b32.xlu0 %v2521, 64
      %v2557 = vpop.permute.xlu0 %2556
      %2558 = vrot.lane.b32.xlu0 %v2523, 64
      %v2559 = vpop.permute.xlu0 %2558
      %2560 = vrot.lane.b32.xlu0 %v2525, 64
      %v2561 = vpop.permute.xlu0 %2560
      %2562 = vrot.lane.b32.xlu0 %v2527, 64
      %v2563 = vpop.permute.xlu0 %2562
      %2564 = vrot.lane.b32.xlu0 %v2529, 64
      %v2565 = vpop.permute.xlu0 %2564
      %2566 = vrot.lane.b32.xlu0 %v2531, 64
      %v2567 = vpop.permute.xlu0 %2566
      %v2586 = vsel %vm1233, %v1920, %v1961
      %v2587 = vsel %vm1233, %v1858, %v1963
      %v2588 = vsel %vm1233, %v1860, %v1965
      %v2589 = vsel %vm1233, %v1862, %v1967
      %v2590 = vsel %vm1233, %v1864, %v1969
      %v2591 = vsel %vm1233, %v1866, %v1971
      %v2592 = vsel %vm1233, %v1868, %v1973
      %v2593 = vsel %vm1233, %v1870, %v1975
      %v2594 = vsel %vm1233, %v1872, %v1977
      %v2595 = vsel %vm1233, %v1874, %v1979
      %v2596 = vsel %vm1233, %v1876, %v1981
      %v2597 = vsel %vm1233, %v1878, %v1983
      %v2598 = vsel %vm1233, %v1880, %v1985
      %v2599 = vsel %vm1233, %v1882, %v1987
      %v2600 = vsel %vm1233, %v1884, %v1989
      %v2601 = vsel %vm1233, %v1886, %v1991
      %v2602 = vsel %vm1233, %v1888, %v1993
      %v2603 = vsel %vm1233, %v1890, %v1995
      %v2604 = vsel %vm1257, %v2586, %v2052
      %v2605 = vsel %vm1257, %v2587, %v2054
      %v2606 = vsel %vm1257, %v2588, %v2056
      %v2607 = vsel %vm1257, %v2589, %v2058
      %v2608 = vsel %vm1257, %v2590, %v2060
      %v2609 = vsel %vm1257, %v2591, %v2062
      %v2610 = vsel %vm1257, %v2592, %v2064
      %v2611 = vsel %vm1257, %v2593, %v2066
      %v2612 = vsel %vm1257, %v2594, %v2068
      %v2613 = vsel %vm1257, %v2595, %v2070
      %v2614 = vsel %vm1257, %v2596, %v2072
      %v2615 = vsel %vm1257, %v2597, %v2074
      %v2616 = vsel %vm1257, %v2598, %v2076
      %v2617 = vsel %vm1257, %v2599, %v2078
      %v2618 = vsel %vm1257, %v2600, %v2080
      %v2619 = vsel %vm1257, %v2601, %v2082
      %v2620 = vsel %vm1257, %v2602, %v2084
      %v2621 = vsel %vm1257, %v2603, %v2086
      %v2622 = vsel %vm1281, %v2604, %v2110
      %v2623 = vsel %vm1281, %v2605, %v2112
      %v2624 = vsel %vm1281, %v2606, %v2114
      %v2625 = vsel %vm1281, %v2607, %v2116
      %v2626 = vsel %vm1281, %v2608, %v2118
      %v2627 = vsel %vm1281, %v2609, %v2120
      %v2628 = vsel %vm1281, %v2610, %v2122
      %v2629 = vsel %vm1281, %v2611, %v2124
      %v2630 = vsel %vm1281, %v2612, %v2126
      %v2631 = vsel %vm1281, %v2613, %v2128
      %v2632 = vsel %vm1281, %v2614, %v2130
      %v2633 = vsel %vm1281, %v2615, %v2132
      %v2634 = vsel %vm1281, %v2616, %v2134
      %v2635 = vsel %vm1281, %v2617, %v2136
      %v2636 = vsel %vm1281, %v2618, %v2138
      %v2637 = vsel %vm1281, %v2619, %v2140
      %v2638 = vsel %vm1281, %v2620, %v2142
      %v2639 = vsel %vm1281, %v2621, %v2144
      %v2640 = vsel %vm1305, %v2622, %v2201
      %v2641 = vsel %vm1305, %v2623, %v2203
      %v2642 = vsel %vm1305, %v2624, %v2205
      %v2643 = vsel %vm1305, %v2625, %v2207
      %v2644 = vsel %vm1305, %v2626, %v2209
      %v2645 = vsel %vm1305, %v2627, %v2211
      %v2646 = vsel %vm1305, %v2628, %v2213
      %v2647 = vsel %vm1305, %v2629, %v2215
      %v2648 = vsel %vm1305, %v2630, %v2217
      %v2649 = vsel %vm1305, %v2631, %v2219
      %v2650 = vsel %vm1305, %v2632, %v2221
      %v2651 = vsel %vm1305, %v2633, %v2223
      %v2652 = vsel %vm1305, %v2634, %v2225
      %v2653 = vsel %vm1305, %v2635, %v2227
      %v2654 = vsel %vm1305, %v2636, %v2229
      %v2655 = vsel %vm1305, %v2637, %v2231
      %v2656 = vsel %vm1305, %v2638, %v2233
      %v2657 = vsel %vm1305, %v2639, %v2235
      %v2658 = vsel %vm1329, %v2640, %v2292
      %v2659 = vsel %vm1329, %v2641, %v2294
      %v2660 = vsel %vm1329, %v2642, %v2296
      %v2661 = vsel %vm1329, %v2643, %v2298
      %v2662 = vsel %vm1329, %v2644, %v2300
      %v2663 = vsel %vm1329, %v2645, %v2302
      %v2664 = vsel %vm1329, %v2646, %v2304
      %v2665 = vsel %vm1329, %v2647, %v2306
      %v2666 = vsel %vm1329, %v2648, %v2308
      %v2667 = vsel %vm1329, %v2649, %v2310
      %v2668 = vsel %vm1329, %v2650, %v2312
      %v2669 = vsel %vm1329, %v2651, %v2314
      %v2670 = vsel %vm1329, %v2652, %v2316
      %v2671 = vsel %vm1329, %v2653, %v2318
      %v2672 = vsel %vm1329, %v2654, %v2320
      %v2673 = vsel %vm1329, %v2655, %v2322
      %v2674 = vsel %vm1329, %v2656, %v2324
      %v2675 = vsel %vm1329, %v2657, %v2326
      %v2676 = vsel %vm1353, %v2658, %v2351
      %v2677 = vsel %vm1353, %v2659, %v2353
      %v2678 = vsel %vm1353, %v2660, %v2355
      %v2679 = vsel %vm1353, %v2661, %v2357
      %v2680 = vsel %vm1353, %v2662, %v2359
      %v2681 = vsel %vm1353, %v2663, %v2361
      %v2682 = vsel %vm1353, %v2664, %v2363
      %v2683 = vsel %vm1353, %v2665, %v2365
      %v2684 = vsel %vm1353, %v2666, %v2367
      %v2685 = vsel %vm1353, %v2667, %v2369
      %v2686 = vsel %vm1353, %v2668, %v2371
      %v2687 = vsel %vm1353, %v2669, %v2373
      %v2688 = vsel %vm1353, %v2670, %v2375
      %v2689 = vsel %vm1353, %v2671, %v2377
      %v2690 = vsel %vm1353, %v2672, %v2379
      %v2691 = vsel %vm1353, %v2673, %v2381
      %v2692 = vsel %vm1353, %v2674, %v2383
      %v2693 = vsel %vm1353, %v2675, %v2385
      %v2694 = vsel %vm1377, %v2676, %v2442
      %v2695 = vsel %vm1377, %v2677, %v2444
      %v2696 = vsel %vm1377, %v2678, %v2446
      %v2697 = vsel %vm1377, %v2679, %v2448
      %v2698 = vsel %vm1377, %v2680, %v2450
      %v2699 = vsel %vm1377, %v2681, %v2452
      %v2700 = vsel %vm1377, %v2682, %v2454
      %v2701 = vsel %vm1377, %v2683, %v2456
      %v2702 = vsel %vm1377, %v2684, %v2458
      %v2703 = vsel %vm1377, %v2685, %v2460
      %v2704 = vsel %vm1377, %v2686, %v2462
      %v2705 = vsel %vm1377, %v2687, %v2464
      %v2706 = vsel %vm1377, %v2688, %v2466
      %v2707 = vsel %vm1377, %v2689, %v2468
      %v2708 = vsel %vm1377, %v2690, %v2470
      %v2709 = vsel %vm1377, %v2691, %v2472
      %v2710 = vsel %vm1377, %v2692, %v2474
      %v2711 = vsel %vm1377, %v2693, %v2476
      %v2712 = vsel %vm1401, %v2694, %v2533
      %v2713 = vsel %vm1401, %v2695, %v2535
      %v2714 = vsel %vm1401, %v2696, %v2537
      %v2715 = vsel %vm1401, %v2697, %v2539
      %v2716 = vsel %vm1401, %v2698, %v2541
      %v2717 = vsel %vm1401, %v2699, %v2543
      %v2718 = vsel %vm1401, %v2700, %v2545
      %v2719 = vsel %vm1401, %v2701, %v2547
      %v2720 = vsel %vm1401, %v2702, %v2549
      %v2721 = vsel %vm1401, %v2703, %v2551
      %v2722 = vsel %vm1401, %v2704, %v2553
      %v2723 = vsel %vm1401, %v2705, %v2555
      %v2724 = vsel %vm1401, %v2706, %v2557
      %v2725 = vsel %vm1401, %v2707, %v2559
      %v2726 = vsel %vm1401, %v2708, %v2561
      %v2727 = vsel %vm1401, %v2709, %v2563
      %v2728 = vsel %vm1401, %v2710, %v2565
      %v2729 = vsel %vm1401, %v2711, %v2567
      %v2730 = vpack.c.bf16 %v2713, %v2712
      %v2731 = vpack.c.bf16 %v2715, %v2714
      %v2732 = vpack.c.bf16 %v2717, %v2716
      %v2733 = vpack.c.bf16 %v2719, %v2718
      %v2734 = vpack.c.bf16 %v2721, %v2720
      %v2735 = vpack.c.bf16 %v2723, %v2722
      %v2736 = vpack.c.bf16 %v2725, %v2724
      %v2737 = vpack.c.bf16 %v2727, %v2726
      %v2738 = vpack.c.bf16 %v2729, %v2728
      %v2739 = vld [vmem:[%s4] sm:$0xf]
      %v2740 = vld [vmem:[%s4 + $0x4] sm:$0xf]
      %v2741 = vld [vmem:[%s4 + $0x8] sm:$0xf]
      %v2742 = vld [vmem:[%s4 + $0xc] sm:$0xf]
      %v2743 = vld [vmem:[%s4 + $0x10] sm:$0xf]
      %v2744 = vld [vmem:[%s4 + $0x14] sm:$0xf]
      %v2745 = vld [vmem:[%s4 + $0x18] sm:$0xf]
      %v2746 = vld [vmem:[%s4 + $0x1c] sm:$0xf]
      %v2747 = vld [vmem:[%s4 + $0x20] sm:$0xf]
      %v2748 = vld [vmem:[%s5] sm:$0x1]
      %v2750 = vlaneseq
      %v2751 = vshrl.u32 %v2750, 7
      %v2752 = vsub.s32 0, %v2751
      %v2753 = vrot.slane %v2748, %v2752
      %v2764 = vunpack.c.l.b16 %v2739
      %v2765 = vunpack.c.l.b16 %v2740
      %v2766 = vunpack.c.l.b16 %v2741
      %v2767 = vunpack.c.l.b16 %v2742
      %v2768 = vunpack.c.l.b16 %v2743
      %v2769 = vunpack.c.l.b16 %v2744
      %v2770 = vunpack.c.l.b16 %v2745
      %v2771 = vunpack.c.l.b16 %v2746
      %v2772 = vunpack.c.l.b16 %v2747
      %v2773 = vpack.c.b16 %v2765, %v2764
      %v2774 = vpack.c.b16 %v2767, %v2766
      %v2775 = vpack.c.b16 %v2769, %v2768
      %v2776 = vpack.c.b16 %v2771, %v2770
      %v2777 = vpack.c.b16 %v2772, %v2772
      %v2783 = vsel %vm1480, %v2730, 0
      %v2786 = vsel %vm1480, %v2731, 0
      %v2789 = vsel %vm1480, %v2732, 0
      %v2792 = vsel %vm1480, %v2733, 0
      %v2795 = vsel %vm1480, %v2734, 0
      %v2798 = vsel %vm1480, %v2735, 0
      %v2801 = vsel %vm1480, %v2736, 0
      %v2804 = vsel %vm1480, %v2737, 0
      %v2807 = vsel %vm1480, %v2738, 0
      %v2810 = vsel %vm808, %v2777, 0
      %2812 = vmatprep.subr.bf16.mxu0 0
      %2813 = vmatpush1.bf16.msra.mxu0 0
      %2814 = vmatprep.subr.bf16.mxu0 0
      %2815 = vmatpush1.bf16.msra.mxu0 0
      %2816 = vmatprep.subr.bf16.mxu0 0
      %2817 = vmatpush1.bf16.msra.mxu0 0
      %2818 = vmatprep.subr.bf16.mxu0 0
      %2819 = vmatpush1.bf16.msra.mxu0 %v2810
      %2820 = vmatprep.subr.bf16.mxu0 0
      %2821 = vmatpush1.bf16.msra.mxu0 %v2776
      %2822 = vmatprep.subr.bf16.mxu0 0
      %2823 = vmatpush1.bf16.msra.mxu0 %v2775
      %2824 = vmatprep.subr.bf16.mxu0 0
      %2825 = vmatpush1.bf16.msra.mxu0 %v2774
      %2826 = vmatprep.subr.bf16.mxu0 0
      %2827 = vmatpush1.bf16.msra.mxu0 %v2773
      %2828 = vmatprep.subr.bf16.mxu0 0
      %2829 = vmatpush2.bf16.msra.mxu0 0
      %2830 = vmatprep.subr.bf16.mxu0 0
      %2831 = vmatpush2.bf16.msra.mxu0 0
      %2832 = vmatprep.subr.bf16.mxu0 0
      %2833 = vmatpush2.bf16.msra.mxu0 0
      %2834 = vmatprep.subr.bf16.mxu0 0
      %2835 = vmatpush2.bf16.msra.mxu0 0
      %2836 = vmatprep.subr.bf16.mxu0 0
      %2837 = vmatpush2.bf16.msra.mxu0 0
      %2838 = vmatprep.subr.bf16.mxu0 0
      %2839 = vmatpush2.bf16.msra.mxu0 0
      %2840 = vmatprep.subr.bf16.mxu0 0
      %2841 = vmatpush2.bf16.msra.mxu0 0
      %2842 = vmatprep.subr.bf16.mxu0 0
      %2843 = vmatpush2.bf16.msra.mxu0 0
      %2844 = vmatprep.mubr.bf16.mxu0 0
      %2845 = vmatmul.mubr.bf16.gmra.mxu0 %v2783
      %v2846 = vpop.f32.mrf.mxu0
      %v2847 = vadd.f32 %v2753, %v2846
      %v2848 = vpop.f32.mrf.mxu0
      %v2849 = vpop.f32.mrf.mxu0
      %v2850 = vadd.f32 %v2753, %v2849
      %v2851 = vpop.f32.mrf.mxu0
      %2852 = vmatprep.mubr.bf16.mxu0 0
      %2853 = vmatmul.mubr.bf16.gmra.mxu0 %v2786
      %v2854 = vpop.f32.mrf.mxu0
      %v2855 = vadd.f32 %v2753, %v2854
      %v2856 = vpop.f32.mrf.mxu0
      %v2857 = vpop.f32.mrf.mxu0
      %v2858 = vadd.f32 %v2753, %v2857
      %v2859 = vpop.f32.mrf.mxu0
      %2860 = vmatprep.mubr.bf16.mxu0 0
      %2861 = vmatmul.mubr.bf16.gmra.mxu0 %v2789
      %v2862 = vpop.f32.mrf.mxu0
      %v2863 = vadd.f32 %v2753, %v2862
      %v2864 = vpop.f32.mrf.mxu0
      %v2865 = vpop.f32.mrf.mxu0
      %v2866 = vadd.f32 %v2753, %v2865
      %v2867 = vpop.f32.mrf.mxu0
      %2868 = vmatprep.mubr.bf16.mxu0 0
      %2869 = vmatmul.mubr.bf16.gmra.mxu0 %v2792
      %v2870 = vpop.f32.mrf.mxu0
      %v2871 = vadd.f32 %v2753, %v2870
      %v2872 = vpop.f32.mrf.mxu0
      %v2873 = vpop.f32.mrf.mxu0
      %v2874 = vadd.f32 %v2753, %v2873
      %v2875 = vpop.f32.mrf.mxu0
      %2876 = vmatprep.mubr.bf16.mxu0 0
      %2877 = vmatmul.mubr.bf16.gmra.mxu0 %v2795
      %v2878 = vpop.f32.mrf.mxu0
      %v2879 = vadd.f32 %v2753, %v2878
      %v2880 = vpop.f32.mrf.mxu0
      %v2881 = vpop.f32.mrf.mxu0
      %v2882 = vadd.f32 %v2753, %v2881
      %v2883 = vpop.f32.mrf.mxu0
      %2884 = vmatprep.mubr.bf16.mxu0 0
      %2885 = vmatmul.mubr.bf16.gmra.mxu0 %v2798
      %v2886 = vpop.f32.mrf.mxu0
      %v2887 = vadd.f32 %v2753, %v2886
      %v2888 = vpop.f32.mrf.mxu0
      %v2889 = vpop.f32.mrf.mxu0
      %v2890 = vadd.f32 %v2753, %v2889
      %v2891 = vpop.f32.mrf.mxu0
      %2892 = vmatprep.mubr.bf16.mxu0 0
      %2893 = vmatmul.mubr.bf16.gmra.mxu0 %v2801
      %v2894 = vpop.f32.mrf.mxu0
      %v2895 = vadd.f32 %v2753, %v2894
      %v2896 = vpop.f32.mrf.mxu0
      %v2897 = vpop.f32.mrf.mxu0
      %v2898 = vadd.f32 %v2753, %v2897
      %v2899 = vpop.f32.mrf.mxu0
      %2900 = vmatprep.mubr.bf16.mxu0 0
      %2901 = vmatmul.mubr.bf16.gmra.mxu0 %v2804
      %v2902 = vpop.f32.mrf.mxu0
      %v2903 = vadd.f32 %v2753, %v2902
      %v2904 = vpop.f32.mrf.mxu0
      %v2905 = vpop.f32.mrf.mxu0
      %v2906 = vadd.f32 %v2753, %v2905
      %v2907 = vpop.f32.mrf.mxu0
      %2908 = vmatprep.mubr.bf16.mxu0 0
      %2909 = vmatmul.mubr.bf16.gmra.mxu0 %v2807
      %v2910 = vpop.f32.mrf.mxu0
      %v2911 = vadd.f32 %v2753, %v2910
      %v2912 = vpop.f32.mrf.mxu0
      %v2913 = vpop.f32.mrf.mxu0
      %v2914 = vadd.f32 %v2753, %v2913
      %v2915 = vpop.f32.mrf.mxu0
      %2916 = vdwg.mxu0
      %v2935 = vadd.f32 %v2847, %v1002
      %v2936 = vadd.f32 %v2850, %v1004
      %v2937 = vadd.f32 %v2855, %v1006
      %v2938 = vadd.f32 %v2858, %v1008
      %v2939 = vadd.f32 %v2863, %v1010
      %v2940 = vadd.f32 %v2866, %v1012
      %v2941 = vadd.f32 %v2871, %v1014
      %v2942 = vadd.f32 %v2874, %v1016
      %v2943 = vadd.f32 %v2879, %v1018
      %v2944 = vadd.f32 %v2882, %v1020
      %v2945 = vadd.f32 %v2887, %v1022
      %v2946 = vadd.f32 %v2890, %v1024
      %v2947 = vadd.f32 %v2895, %v1026
      %v2948 = vadd.f32 %v2898, %v1028
      %v2949 = vadd.f32 %v2903, %v1030
      %v2950 = vadd.f32 %v2906, %v1032
      %v2951 = vadd.f32 %v2911, %v1034
      %v2952 = vadd.f32 %v2914, %v1036
      %v2953 = vmax.f32 %v2935, 0.0
      %v2954 = vmax.f32 %v2936, 0.0
      %v2955 = vmax.f32 %v2937, 0.0
      %v2956 = vmax.f32 %v2938, 0.0
      %v2957 = vmax.f32 %v2939, 0.0
      %v2958 = vmax.f32 %v2940, 0.0
      %v2959 = vmax.f32 %v2941, 0.0
      %v2960 = vmax.f32 %v2942, 0.0
      %v2961 = vmax.f32 %v2943, 0.0
      %v2962 = vmax.f32 %v2944, 0.0
      %v2963 = vmax.f32 %v2945, 0.0
      %v2964 = vmax.f32 %v2946, 0.0
      %v2965 = vmax.f32 %v2947, 0.0
      %v2966 = vmax.f32 %v2948, 0.0
      %v2967 = vmax.f32 %v2949, 0.0
      %v2968 = vmax.f32 %v2950, 0.0
      %v2969 = vmax.f32 %v2951, 0.0
      %v2970 = vmax.f32 %v2952, 0.0
      %2971 = vst.msk [vmem:[%s307] sm:$0xff] %vm1233, %v2953
      %2972 = vst.msk [vmem:[%s307 + $0x8] sm:$0xff] %vm1233, %v2954
      %2973 = vst.msk [vmem:[%s307 + $0x10] sm:$0xff] %vm1233, %v2955
      %2974 = vst.msk [vmem:[%s307 + $0x18] sm:$0xff] %vm1233, %v2956
      %2975 = vst.msk [vmem:[%s307 + $0x20] sm:$0xff] %vm1233, %v2957
      %2976 = vst.msk [vmem:[%s307 + $0x28] sm:$0xff] %vm1233, %v2958
      %2977 = vst.msk [vmem:[%s307 + $0x30] sm:$0xff] %vm1233, %v2959
      %2978 = vst.msk [vmem:[%s307 + $0x38] sm:$0xff] %vm1233, %v2960
      %2979 = vst.msk [vmem:[%s307 + $0x40] sm:$0xff] %vm1233, %v2961
      %2980 = vst.msk [vmem:[%s307 + $0x48] sm:$0xff] %vm1233, %v2962
      %2981 = vst.msk [vmem:[%s307 + $0x50] sm:$0xff] %vm1233, %v2963
      %2982 = vst.msk [vmem:[%s307 + $0x58] sm:$0xff] %vm1233, %v2964
      %2983 = vst.msk [vmem:[%s307 + $0x60] sm:$0xff] %vm1233, %v2965
      %2984 = vst.msk [vmem:[%s307 + $0x68] sm:$0xff] %vm1233, %v2966
      %2985 = vst.msk [vmem:[%s307 + $0x70] sm:$0xff] %vm1233, %v2967
      %2986 = vst.msk [vmem:[%s307 + $0x78] sm:$0xff] %vm1233, %v2968
      %2987 = vst.msk [vmem:[%s307 + $0x80] sm:$0xff] %vm1233, %v2969
      %2988 = vst.msk [vmem:[%s307 + $0x88] sm:$0xff] %vm1233, %v2970
      %p2989 = scmp.lt.s32.totalorder %s21, 1
      %s2990 = scalar_select %p2989, %s21, 1
      %p2991 = scmp.lt.s32.totalorder %s22, 1
      %s2992 = scalar_select %p2991, %s22, 1
      %s2993 = smul.addr %s2992, 18
      %s2994 = smul.addr %s2990, 36
      %s2995 = sadd.s32 %s2993, %s2994
      %s2996 = smul.addr %s2995, 8
      %s2997 = scalar_lea.vmem %s6, %s2996
      // Predicated region
      $region45: #{tpu_custom_call.1} parent=43 // pred_check
        %p2998 = pneg %p187
      $region46: #{tpu_custom_call.1} parent=43 // pred_check_branch
        %3000 = sbr.rel (%p2998) target = $region48
      $region47: #{tpu_custom_call.1} parent=43 // pred_region
        _
      $region48: #{tpu_custom_call.1} parent=43 // pred_fallthru
        _
    $region44: #{tpu_custom_call.1} parent=5 // pred_fallthru
      _
    %p3001 = scmp.le.s32.totalorder 2, %s12
    // Predicated region
    $region49: #{tpu_custom_call.1} parent=5 // pred_check
      %p3002 = pneg %p3001
    $region50: #{tpu_custom_call.1} parent=5 // pred_check_branch
      %3004 = sbr.rel (%p3002) target = $region52
    $region51: #{tpu_custom_call.1} parent=5 // pred_region
      %s3005 = ssub.s32 %s12, 2
      // Predicated region
      $region53: #{tpu_custom_call.1} parent=51 // pred_check
        %p3006 = pneg %p193
      $region54: #{tpu_custom_call.1} parent=51 // pred_check_branch
        %3008 = sbr.rel (%p3006) target = $region56
      $region55: #{tpu_custom_call.1} parent=51 // pred_region
        %p3009 = scmp.lt.s32.totalorder %s23, 1
        %s3010 = scalar_select %p3009, %s23, 1
        %p3011 = scmp.lt.s32.totalorder %s24, 1
        %s3012 = scalar_select %p3011, %s24, 1
        %s3013 = smul.addr %s3012, 18
        %s3014 = smul.addr %s3010, 36
        %s3015 = sadd.s32 %s3013, %s3014
        %s3016 = smul.addr %s3015, 8
        %s3017 = scalar_lea.vmem %s6, %s3016
      $region56: #{tpu_custom_call.1} parent=51 // pred_fallthru
        _
    $region52: #{tpu_custom_call.1} parent=5 // pred_fallthru
      _
  $region6: #{tpu_custom_call.1} parent=0 // loop_footer
    %s16 = sadd.s32 1, %s12
  $region7: #{tpu_custom_call.1} parent=0 // loop_footer_branch
    %11 = sbr.rel target = $region3
  $region8: #{tpu_custom_call.1} parent=0 // loop_exit
    _

</llo_original>
